<compile_context>
chip_gen: v6e
topology: v6e:2x2x1
jax: 0.10.0
libtpu: 0.0.40
codegen_flags: <defaults>
</compile_context>

<pallas_src>
import functools

import jax
import jax.numpy as jnp
from jax.experimental import pallas as pl
from jax.experimental.pallas import tpu as pltpu


# ----------------------------------------------------------------------------
# Fused Pallas kernel (all LSTM layers + final FC)
# ----------------------------------------------------------------------------
def make_fused_lstm_kernel(T, B, H, num_layers):
    """Builds the fused kernel.

    Ref layout (positional):
      refs[0]                    : x      (T*B, D)  time-major flattened input
      refs[1+3l], [2+3l], [3+3l] : wih_l (Din,4H), whh_l (H,4H), b_l (1,4H)
      refs[-3], refs[-2]         : fc_w (H,1), fc_b (1,1)
      refs[-1]                   : out   (B,1)
    Gate order along the 4H axis matches PyTorch nn.LSTM: (i, f, g, o).
    """

    def kernel(*refs):
        fcw_ref = refs[1 + 3 * num_layers]
        fcb_ref = refs[2 + 3 * num_layers]
        o_ref = refs[3 + 3 * num_layers]

        seq = refs[0][...]                      # (T*B, Din), compute dtype
        h = None
        for l in range(num_layers):
            wih = refs[1 + 3 * l][...]          # (Din, 4H)
            whh = refs[2 + 3 * l][...]          # (H,   4H)
            b = refs[3 + 3 * l][...]            # (1,   4H) f32

            # Hoisted input projection + bias for ALL timesteps at once:
            # one MXU matmul with M = T*B rows, off the serial h-dependency chain.
            pre = jnp.dot(seq, wih, preferred_element_type=jnp.float32) + b  # (T*B,4H)

            h = jnp.zeros((B, H), jnp.float32)
            c = jnp.zeros((B, H), jnp.float32)
            hs = []
            # TODO(synk): for long sequences swap this static unroll for a
            # lax.fori_loop over a (T, B, 4H) VMEM scratch to bound compile time.
            for t in range(T):
                gates = pre[t * B:(t + 1) * B, :] + jnp.dot(
                    h.astype(whh.dtype), whh, preferred_element_type=jnp.float32)
                # NOTE: at H=32 these gate slices are sub-128-lane; for production
                # sizes pad H to a multiple of 128 so the elementwise path is
                # lane-dense.
                i_g = jax.nn.sigmoid(gates[:, 0 * H:1 * H])
                f_g = jax.nn.sigmoid(gates[:, 1 * H:2 * H])
                g_g = jnp.tanh(gates[:, 2 * H:3 * H])
                o_g = jax.nn.sigmoid(gates[:, 3 * H:4 * H])
                c = f_g * c + i_g * g_g
                h = o_g * jnp.tanh(c)
                hs.append(h)

            if l + 1 < num_layers:
                # Next layer consumes the full hidden sequence, kept VMEM/vreg
                # resident (no HBM round-trip between layers).
                seq = jnp.concatenate(hs, axis=0).astype(seq.dtype)  # (T*B, H)

        # Fused final FC on the last timestep's hidden state: out = h_T @ W + b.
        out = jnp.dot(h.astype(fcw_ref.dtype), fcw_ref[...],
                      preferred_element_type=jnp.float32) + fcb_ref[...]
        o_ref[...] = out.astype(o_ref.dtype)

    return kernel


# ----------------------------------------------------------------------------
# Wrapper
# ----------------------------------------------------------------------------
@functools.partial(jax.jit, static_argnames=("compute_dtype",))
def lstm_forward(x_btd, layer_params, fc_w, fc_b, *, compute_dtype=jnp.float32):
    """Full forward pass.  x_btd: (B, T, D) batch-first, like the PyTorch module."""
    B, T, D = x_btd.shape
    H = layer_params[0][1].shape[0]
    L = len(layer_params)

    # One small boundary transpose to time-major + flatten so per-timestep rows are
    # the contiguous block [t*B, (t+1)*B).  Everything else happens in one kernel.
    x2 = jnp.transpose(x_btd, (1, 0, 2)).reshape(T * B, D).astype(compute_dtype)

    args = [x2]
    for wih, whh, b in layer_params:
        # MXU operands optionally bf16 (v6e/v7x native); biases/state stay f32.
        args += [wih.astype(compute_dtype), whh.astype(compute_dtype),
                 b.astype(jnp.float32)]
    args += [fc_w.astype(compute_dtype), fc_b.astype(jnp.float32)]

    kernel = make_fused_lstm_kernel(T, B, H, L)
    return pl.pallas_call(
        kernel,
        out_shape=jax.ShapeDtypeStruct((B, 1), jnp.float32),
        in_specs=[pl.BlockSpec(memory_space=pltpu.MemorySpace.VMEM)
                  for _ in range(len(args))],
        out_specs=pl.BlockSpec(memory_space=pltpu.MemorySpace.VMEM),
    )(*args)


# ----------------------------------------------------------------------------
# Pure-JAX reference (for correctness checking)
# ----------------------------------------------------------------------------
def lstm_ref(x_btd, layer_params, fc_w, fc_b):
    B, T, _ = x_btd.shape
    h_in = x_btd
    for wih, whh, b in layer_params:
        H = whh.shape[0]
        h = jnp.zeros((B, H), jnp.float32)
        c = jnp.zeros((B, H), jnp.float32)
        outs = []
        for t in range(T):
            gates = h_in[:, t, :] @ wih + h @ whh + b
            i_g = jax.nn.sigmoid(gates[:, 0 * H:1 * H])
            f_g = jax.nn.sigmoid(gates[:, 1 * H:2 * H])
            g_g = jnp.tanh(gates[:, 2 * H:3 * H])
            o_g = jax.nn.sigmoid(gates[:, 3 * H:4 * H])
            c = f_g * c + i_g * g_g
            h = o_g * jnp.tanh(c)
            outs.append(h)
        h_in = jnp.stack(outs, axis=1)
    return h_in[:, -1, :] @ fc_w + fc_b


# ----------------------------------------------------------------------------
# Parameter init (deterministic, PyTorch-style U(-1/sqrt(H), 1/sqrt(H)))
# ----------------------------------------------------------------------------
def init_params(key, input_size, hidden_size, num_layers):
    bound = 1.0 / jnp.sqrt(jnp.float32(hidden_size))
    layer_params = []
    for layer in range(num_layers):
        d_in = input_size if layer == 0 else hidden_size
        key, k1, k2, k3, k4 = jax.random.split(key, 5)
        # stored transposed relative to PyTorch: (d_in, 4H), (H, 4H)
        wih = jax.random.uniform(k1, (d_in, 4 * hidden_size), jnp.float32, -bound, bound)
        whh = jax.random.uniform(k2, (hidden_size, 4 * hidden_size), jnp.float32, -bound, bound)
        b_ih = jax.random.uniform(k3, (1, 4 * hidden_size), jnp.float32, -bound, bound)
        b_hh = jax.random.uniform(k4, (1, 4 * hidden_size), jnp.float32, -bound, bound)
        layer_params.append((wih, whh, b_ih + b_hh))
    key, k5, k6 = jax.random.split(key, 3)
    fc_w = jax.random.uniform(k5, (hidden_size, 1), jnp.float32, -bound, bound)
    fc_b = jax.random.uniform(k6, (1, 1), jnp.float32, -bound, bound)
    return layer_params, fc_w, fc_b


if __name__ == "__main__":
    # Small shapes consistent with the module: batch=2, seq=8, input=16, hidden=32, 2 layers.
    B, T, D, H, L = 2, 8, 16, 32, 2

    key = jax.random.PRNGKey(0)
    key, kx = jax.random.split(key)
    x = jax.random.normal(kx, (B, T, D), jnp.float32)  # batch-first, like PyTorch

    layer_params, fc_w, fc_b = init_params(key, D, H, L)
    ref = lstm_ref(x, layer_params, fc_w, fc_b)

    # f32 compute path (tight check).
    out = lstm_forward(x, layer_params, fc_w, fc_b, compute_dtype=jnp.float32)
    out = jax.block_until_ready(out)
    assert out.shape == (B, 1), out.shape
    assert jnp.allclose(out, ref, atol=1e-3, rtol=1e-3), (out, ref)

    # bf16 MXU operands (v6e/v7x-native); gate math / state stay f32 (loose check).
    out_bf16 = lstm_forward(x, layer_params, fc_w, fc_b, compute_dtype=jnp.bfloat16)
    out_bf16 = jax.block_until_ready(out_bf16)
    assert out_bf16.shape == (B, 1), out_bf16.shape
    assert jnp.allclose(out_bf16, ref, atol=5e-2, rtol=5e-2), (out_bf16, ref)

    print("KERNEL_OK")
</pallas_src>

<mosaic_0001>
module attributes {stable_mosaic.version = 11 : i64} {
  func.func @kernel(%arg0: memref<16x16xf32, #tpu.memory_space<vmem>>, %arg1: memref<16x128xf32, #tpu.memory_space<vmem>>, %arg2: memref<32x128xf32, #tpu.memory_space<vmem>>, %arg3: memref<1x128xf32, #tpu.memory_space<vmem>>, %arg4: memref<32x128xf32, #tpu.memory_space<vmem>>, %arg5: memref<32x128xf32, #tpu.memory_space<vmem>>, %arg6: memref<1x128xf32, #tpu.memory_space<vmem>>, %arg7: memref<32x1xf32, #tpu.memory_space<vmem>>, %arg8: memref<1x1xf32, #tpu.memory_space<vmem>>, %arg9: memref<2x1xf32, #tpu.memory_space<vmem>>) attributes {dimension_semantics = [], scalar_prefetch = 0 : i64, scratch_operands = 0 : i64, tpu.core_type = #tpu.core_type<tc>} {
    %c0 = arith.constant 0 : index
    %c0_0 = arith.constant 0 : index
    %0 = vector.load %arg0[%c0, %c0_0] : memref<16x16xf32, #tpu.memory_space<vmem>>, vector<16x16xf32>
    %c0_1 = arith.constant 0 : index
    %c0_2 = arith.constant 0 : index
    %1 = vector.load %arg1[%c0_1, %c0_2] : memref<16x128xf32, #tpu.memory_space<vmem>>, vector<16x128xf32>
    %c0_3 = arith.constant 0 : index
    %c0_4 = arith.constant 0 : index
    %2 = vector.load %arg2[%c0_3, %c0_4] : memref<32x128xf32, #tpu.memory_space<vmem>>, vector<32x128xf32>
    %c0_5 = arith.constant 0 : index
    %c0_6 = arith.constant 0 : index
    %3 = vector.load %arg3[%c0_5, %c0_6] : memref<1x128xf32, #tpu.memory_space<vmem>>, vector<1x128xf32>
    %cst = arith.constant dense<0.000000e+00> : vector<16x128xf32>
    %4 = tpu.matmul %0, %1, %cst {dimension_numbers = #tpu.dot_dimension_numbers<[1], [0], [0], [1], [0, 0, 1, 1], [], []>} : vector<16x16xf32>, vector<16x128xf32>, vector<16x128xf32> -> vector<16x128xf32>
    %5 = vector.broadcast %3 : vector<1x128xf32> to vector<16x128xf32>
    %6 = arith.addf %4, %5 : vector<16x128xf32>
    %cst_7 = arith.constant 0.000000e+00 : f32
    %7 = vector.broadcast %cst_7 : f32 to vector<2x32xf32>
    %cst_8 = arith.constant 0.000000e+00 : f32
    %8 = vector.broadcast %cst_8 : f32 to vector<2x32xf32>
    %9 = vector.extract_strided_slice %6 {offsets = [0, 0], sizes = [2, 128], strides = [1, 1]} : vector<16x128xf32> to vector<2x128xf32>
    %cst_9 = arith.constant dense<0.000000e+00> : vector<2x128xf32>
    %10 = tpu.matmul %7, %2, %cst_9 {dimension_numbers = #tpu.dot_dimension_numbers<[1], [0], [0], [1], [0, 0, 1, 1], [], []>} : vector<2x32xf32>, vector<32x128xf32>, vector<2x128xf32> -> vector<2x128xf32>
    %11 = arith.addf %9, %10 : vector<2x128xf32>
    %12 = vector.extract_strided_slice %11 {offsets = [0, 0], sizes = [2, 32], strides = [1, 1]} : vector<2x128xf32> to vector<2x32xf32>
    %13 = arith.negf %12 : vector<2x32xf32>
    %14 = math.exp %13 : vector<2x32xf32>
    %cst_10 = arith.constant 1.000000e+00 : f32
    %15 = vector.broadcast %cst_10 : f32 to vector<2x32xf32>
    %16 = arith.addf %15, %14 : vector<2x32xf32>
    %17 = arith.divf %15, %16 : vector<2x32xf32>
    %18 = vector.extract_strided_slice %11 {offsets = [0, 32], sizes = [2, 32], strides = [1, 1]} : vector<2x128xf32> to vector<2x32xf32>
    %19 = arith.negf %18 : vector<2x32xf32>
    %20 = math.exp %19 : vector<2x32xf32>
    %cst_11 = arith.constant 1.000000e+00 : f32
    %21 = vector.broadcast %cst_11 : f32 to vector<2x32xf32>
    %22 = arith.addf %21, %20 : vector<2x32xf32>
    %23 = arith.divf %21, %22 : vector<2x32xf32>
    %24 = vector.extract_strided_slice %11 {offsets = [0, 64], sizes = [2, 32], strides = [1, 1]} : vector<2x128xf32> to vector<2x32xf32>
    %25 = math.tanh %24 : vector<2x32xf32>
    %26 = vector.extract_strided_slice %11 {offsets = [0, 96], sizes = [2, 32], strides = [1, 1]} : vector<2x128xf32> to vector<2x32xf32>
    %27 = arith.negf %26 : vector<2x32xf32>
    %28 = math.exp %27 : vector<2x32xf32>
    %cst_12 = arith.constant 1.000000e+00 : f32
    %29 = vector.broadcast %cst_12 : f32 to vector<2x32xf32>
    %30 = arith.addf %29, %28 : vector<2x32xf32>
    %31 = arith.divf %29, %30 : vector<2x32xf32>
    %32 = arith.mulf %23, %8 : vector<2x32xf32>
    %33 = arith.mulf %17, %25 : vector<2x32xf32>
    %34 = arith.addf %32, %33 : vector<2x32xf32>
    %35 = math.tanh %34 : vector<2x32xf32>
    %36 = arith.mulf %31, %35 : vector<2x32xf32>
    %37 = vector.extract_strided_slice %6 {offsets = [2, 0], sizes = [2, 128], strides = [1, 1]} : vector<16x128xf32> to vector<2x128xf32>
    %cst_13 = arith.constant dense<0.000000e+00> : vector<2x128xf32>
    %38 = tpu.matmul %36, %2, %cst_13 {dimension_numbers = #tpu.dot_dimension_numbers<[1], [0], [0], [1], [0, 0, 1, 1], [], []>} : vector<2x32xf32>, vector<32x128xf32>, vector<2x128xf32> -> vector<2x128xf32>
    %39 = arith.addf %37, %38 : vector<2x128xf32>
    %40 = vector.extract_strided_slice %39 {offsets = [0, 0], sizes = [2, 32], strides = [1, 1]} : vector<2x128xf32> to vector<2x32xf32>
    %41 = arith.negf %40 : vector<2x32xf32>
    %42 = math.exp %41 : vector<2x32xf32>
    %cst_14 = arith.constant 1.000000e+00 : f32
    %43 = vector.broadcast %cst_14 : f32 to vector<2x32xf32>
    %44 = arith.addf %43, %42 : vector<2x32xf32>
    %45 = arith.divf %43, %44 : vector<2x32xf32>
    %46 = vector.extract_strided_slice %39 {offsets = [0, 32], sizes = [2, 32], strides = [1, 1]} : vector<2x128xf32> to vector<2x32xf32>
    %47 = arith.negf %46 : vector<2x32xf32>
    %48 = math.exp %47 : vector<2x32xf32>
    %cst_15 = arith.constant 1.000000e+00 : f32
    %49 = vector.broadcast %cst_15 : f32 to vector<2x32xf32>
    %50 = arith.addf %49, %48 : vector<2x32xf32>
    %51 = arith.divf %49, %50 : vector<2x32xf32>
    %52 = vector.extract_strided_slice %39 {offsets = [0, 64], sizes = [2, 32], strides = [1, 1]} : vector<2x128xf32> to vector<2x32xf32>
    %53 = math.tanh %52 : vector<2x32xf32>
    %54 = vector.extract_strided_slice %39 {offsets = [0, 96], sizes = [2, 32], strides = [1, 1]} : vector<2x128xf32> to vector<2x32xf32>
    %55 = arith.negf %54 : vector<2x32xf32>
    %56 = math.exp %55 : vector<2x32xf32>
    %cst_16 = arith.constant 1.000000e+00 : f32
    %57 = vector.broadcast %cst_16 : f32 to vector<2x32xf32>
    %58 = arith.addf %57, %56 : vector<2x32xf32>
    %59 = arith.divf %57, %58 : vector<2x32xf32>
    %60 = arith.mulf %51, %34 : vector<2x32xf32>
    %61 = arith.mulf %45, %53 : vector<2x32xf32>
    %62 = arith.addf %60, %61 : vector<2x32xf32>
    %63 = math.tanh %62 : vector<2x32xf32>
    %64 = arith.mulf %59, %63 : vector<2x32xf32>
    %65 = vector.extract_strided_slice %6 {offsets = [4, 0], sizes = [2, 128], strides = [1, 1]} : vector<16x128xf32> to vector<2x128xf32>
    %cst_17 = arith.constant dense<0.000000e+00> : vector<2x128xf32>
    %66 = tpu.matmul %64, %2, %cst_17 {dimension_numbers = #tpu.dot_dimension_numbers<[1], [0], [0], [1], [0, 0, 1, 1], [], []>} : vector<2x32xf32>, vector<32x128xf32>, vector<2x128xf32> -> vector<2x128xf32>
    %67 = arith.addf %65, %66 : vector<2x128xf32>
    %68 = vector.extract_strided_slice %67 {offsets = [0, 0], sizes = [2, 32], strides = [1, 1]} : vector<2x128xf32> to vector<2x32xf32>
    %69 = arith.negf %68 : vector<2x32xf32>
    %70 = math.exp %69 : vector<2x32xf32>
    %cst_18 = arith.constant 1.000000e+00 : f32
    %71 = vector.broadcast %cst_18 : f32 to vector<2x32xf32>
    %72 = arith.addf %71, %70 : vector<2x32xf32>
    %73 = arith.divf %71, %72 : vector<2x32xf32>
    %74 = vector.extract_strided_slice %67 {offsets = [0, 32], sizes = [2, 32], strides = [1, 1]} : vector<2x128xf32> to vector<2x32xf32>
    %75 = arith.negf %74 : vector<2x32xf32>
    %76 = math.exp %75 : vector<2x32xf32>
    %cst_19 = arith.constant 1.000000e+00 : f32
    %77 = vector.broadcast %cst_19 : f32 to vector<2x32xf32>
    %78 = arith.addf %77, %76 : vector<2x32xf32>
    %79 = arith.divf %77, %78 : vector<2x32xf32>
    %80 = vector.extract_strided_slice %67 {offsets = [0, 64], sizes = [2, 32], strides = [1, 1]} : vector<2x128xf32> to vector<2x32xf32>
    %81 = math.tanh %80 : vector<2x32xf32>
    %82 = vector.extract_strided_slice %67 {offsets = [0, 96], sizes = [2, 32], strides = [1, 1]} : vector<2x128xf32> to vector<2x32xf32>
    %83 = arith.negf %82 : vector<2x32xf32>
    %84 = math.exp %83 : vector<2x32xf32>
    %cst_20 = arith.constant 1.000000e+00 : f32
    %85 = vector.broadcast %cst_20 : f32 to vector<2x32xf32>
    %86 = arith.addf %85, %84 : vector<2x32xf32>
    %87 = arith.divf %85, %86 : vector<2x32xf32>
    %88 = arith.mulf %79, %62 : vector<2x32xf32>
    %89 = arith.mulf %73, %81 : vector<2x32xf32>
    %90 = arith.addf %88, %89 : vector<2x32xf32>
    %91 = math.tanh %90 : vector<2x32xf32>
    %92 = arith.mulf %87, %91 : vector<2x32xf32>
    %93 = vector.extract_strided_slice %6 {offsets = [6, 0], sizes = [2, 128], strides = [1, 1]} : vector<16x128xf32> to vector<2x128xf32>
    %cst_21 = arith.constant dense<0.000000e+00> : vector<2x128xf32>
    %94 = tpu.matmul %92, %2, %cst_21 {dimension_numbers = #tpu.dot_dimension_numbers<[1], [0], [0], [1], [0, 0, 1, 1], [], []>} : vector<2x32xf32>, vector<32x128xf32>, vector<2x128xf32> -> vector<2x128xf32>
    %95 = arith.addf %93, %94 : vector<2x128xf32>
    %96 = vector.extract_strided_slice %95 {offsets = [0, 0], sizes = [2, 32], strides = [1, 1]} : vector<2x128xf32> to vector<2x32xf32>
    %97 = arith.negf %96 : vector<2x32xf32>
    %98 = math.exp %97 : vector<2x32xf32>
    %cst_22 = arith.constant 1.000000e+00 : f32
    %99 = vector.broadcast %cst_22 : f32 to vector<2x32xf32>
    %100 = arith.addf %99, %98 : vector<2x32xf32>
    %101 = arith.divf %99, %100 : vector<2x32xf32>
    %102 = vector.extract_strided_slice %95 {offsets = [0, 32], sizes = [2, 32], strides = [1, 1]} : vector<2x128xf32> to vector<2x32xf32>
    %103 = arith.negf %102 : vector<2x32xf32>
    %104 = math.exp %103 : vector<2x32xf32>
    %cst_23 = arith.constant 1.000000e+00 : f32
    %105 = vector.broadcast %cst_23 : f32 to vector<2x32xf32>
    %106 = arith.addf %105, %104 : vector<2x32xf32>
    %107 = arith.divf %105, %106 : vector<2x32xf32>
    %108 = vector.extract_strided_slice %95 {offsets = [0, 64], sizes = [2, 32], strides = [1, 1]} : vector<2x128xf32> to vector<2x32xf32>
    %109 = math.tanh %108 : vector<2x32xf32>
    %110 = vector.extract_strided_slice %95 {offsets = [0, 96], sizes = [2, 32], strides = [1, 1]} : vector<2x128xf32> to vector<2x32xf32>
    %111 = arith.negf %110 : vector<2x32xf32>
    %112 = math.exp %111 : vector<2x32xf32>
    %cst_24 = arith.constant 1.000000e+00 : f32
    %113 = vector.broadcast %cst_24 : f32 to vector<2x32xf32>
    %114 = arith.addf %113, %112 : vector<2x32xf32>
    %115 = arith.divf %113, %114 : vector<2x32xf32>
    %116 = arith.mulf %107, %90 : vector<2x32xf32>
    %117 = arith.mulf %101, %109 : vector<2x32xf32>
    %118 = arith.addf %116, %117 : vector<2x32xf32>
    %119 = math.tanh %118 : vector<2x32xf32>
    %120 = arith.mulf %115, %119 : vector<2x32xf32>
    %121 = vector.extract_strided_slice %6 {offsets = [8, 0], sizes = [2, 128], strides = [1, 1]} : vector<16x128xf32> to vector<2x128xf32>
    %cst_25 = arith.constant dense<0.000000e+00> : vector<2x128xf32>
    %122 = tpu.matmul %120, %2, %cst_25 {dimension_numbers = #tpu.dot_dimension_numbers<[1], [0], [0], [1], [0, 0, 1, 1], [], []>} : vector<2x32xf32>, vector<32x128xf32>, vector<2x128xf32> -> vector<2x128xf32>
    %123 = arith.addf %121, %122 : vector<2x128xf32>
    %124 = vector.extract_strided_slice %123 {offsets = [0, 0], sizes = [2, 32], strides = [1, 1]} : vector<2x128xf32> to vector<2x32xf32>
    %125 = arith.negf %124 : vector<2x32xf32>
    %126 = math.exp %125 : vector<2x32xf32>
    %cst_26 = arith.constant 1.000000e+00 : f32
    %127 = vector.broadcast %cst_26 : f32 to vector<2x32xf32>
    %128 = arith.addf %127, %126 : vector<2x32xf32>
    %129 = arith.divf %127, %128 : vector<2x32xf32>
    %130 = vector.extract_strided_slice %123 {offsets = [0, 32], sizes = [2, 32], strides = [1, 1]} : vector<2x128xf32> to vector<2x32xf32>
    %131 = arith.negf %130 : vector<2x32xf32>
    %132 = math.exp %131 : vector<2x32xf32>
    %cst_27 = arith.constant 1.000000e+00 : f32
    %133 = vector.broadcast %cst_27 : f32 to vector<2x32xf32>
    %134 = arith.addf %133, %132 : vector<2x32xf32>
    %135 = arith.divf %133, %134 : vector<2x32xf32>
    %136 = vector.extract_strided_slice %123 {offsets = [0, 64], sizes = [2, 32], strides = [1, 1]} : vector<2x128xf32> to vector<2x32xf32>
    %137 = math.tanh %136 : vector<2x32xf32>
    %138 = vector.extract_strided_slice %123 {offsets = [0, 96], sizes = [2, 32], strides = [1, 1]} : vector<2x128xf32> to vector<2x32xf32>
    %139 = arith.negf %138 : vector<2x32xf32>
    %140 = math.exp %139 : vector<2x32xf32>
    %cst_28 = arith.constant 1.000000e+00 : f32
    %141 = vector.broadcast %cst_28 : f32 to vector<2x32xf32>
    %142 = arith.addf %141, %140 : vector<2x32xf32>
    %143 = arith.divf %141, %142 : vector<2x32xf32>
    %144 = arith.mulf %135, %118 : vector<2x32xf32>
    %145 = arith.mulf %129, %137 : vector<2x32xf32>
    %146 = arith.addf %144, %145 : vector<2x32xf32>
    %147 = math.tanh %146 : vector<2x32xf32>
    %148 = arith.mulf %143, %147 : vector<2x32xf32>
    %149 = vector.extract_strided_slice %6 {offsets = [10, 0], sizes = [2, 128], strides = [1, 1]} : vector<16x128xf32> to vector<2x128xf32>
    %cst_29 = arith.constant dense<0.000000e+00> : vector<2x128xf32>
    %150 = tpu.matmul %148, %2, %cst_29 {dimension_numbers = #tpu.dot_dimension_numbers<[1], [0], [0], [1], [0, 0, 1, 1], [], []>} : vector<2x32xf32>, vector<32x128xf32>, vector<2x128xf32> -> vector<2x128xf32>
    %151 = arith.addf %149, %150 : vector<2x128xf32>
    %152 = vector.extract_strided_slice %151 {offsets = [0, 0], sizes = [2, 32], strides = [1, 1]} : vector<2x128xf32> to vector<2x32xf32>
    %153 = arith.negf %152 : vector<2x32xf32>
    %154 = math.exp %153 : vector<2x32xf32>
    %cst_30 = arith.constant 1.000000e+00 : f32
    %155 = vector.broadcast %cst_30 : f32 to vector<2x32xf32>
    %156 = arith.addf %155, %154 : vector<2x32xf32>
    %157 = arith.divf %155, %156 : vector<2x32xf32>
    %158 = vector.extract_strided_slice %151 {offsets = [0, 32], sizes = [2, 32], strides = [1, 1]} : vector<2x128xf32> to vector<2x32xf32>
    %159 = arith.negf %158 : vector<2x32xf32>
    %160 = math.exp %159 : vector<2x32xf32>
    %cst_31 = arith.constant 1.000000e+00 : f32
    %161 = vector.broadcast %cst_31 : f32 to vector<2x32xf32>
    %162 = arith.addf %161, %160 : vector<2x32xf32>
    %163 = arith.divf %161, %162 : vector<2x32xf32>
    %164 = vector.extract_strided_slice %151 {offsets = [0, 64], sizes = [2, 32], strides = [1, 1]} : vector<2x128xf32> to vector<2x32xf32>
    %165 = math.tanh %164 : vector<2x32xf32>
    %166 = vector.extract_strided_slice %151 {offsets = [0, 96], sizes = [2, 32], strides = [1, 1]} : vector<2x128xf32> to vector<2x32xf32>
    %167 = arith.negf %166 : vector<2x32xf32>
    %168 = math.exp %167 : vector<2x32xf32>
    %cst_32 = arith.constant 1.000000e+00 : f32
    %169 = vector.broadcast %cst_32 : f32 to vector<2x32xf32>
    %170 = arith.addf %169, %168 : vector<2x32xf32>
    %171 = arith.divf %169, %170 : vector<2x32xf32>
    %172 = arith.mulf %163, %146 : vector<2x32xf32>
    %173 = arith.mulf %157, %165 : vector<2x32xf32>
    %174 = arith.addf %172, %173 : vector<2x32xf32>
    %175 = math.tanh %174 : vector<2x32xf32>
    %176 = arith.mulf %171, %175 : vector<2x32xf32>
    %177 = vector.extract_strided_slice %6 {offsets = [12, 0], sizes = [2, 128], strides = [1, 1]} : vector<16x128xf32> to vector<2x128xf32>
    %cst_33 = arith.constant dense<0.000000e+00> : vector<2x128xf32>
    %178 = tpu.matmul %176, %2, %cst_33 {dimension_numbers = #tpu.dot_dimension_numbers<[1], [0], [0], [1], [0, 0, 1, 1], [], []>} : vector<2x32xf32>, vector<32x128xf32>, vector<2x128xf32> -> vector<2x128xf32>
    %179 = arith.addf %177, %178 : vector<2x128xf32>
    %180 = vector.extract_strided_slice %179 {offsets = [0, 0], sizes = [2, 32], strides = [1, 1]} : vector<2x128xf32> to vector<2x32xf32>
    %181 = arith.negf %180 : vector<2x32xf32>
    %182 = math.exp %181 : vector<2x32xf32>
    %cst_34 = arith.constant 1.000000e+00 : f32
    %183 = vector.broadcast %cst_34 : f32 to vector<2x32xf32>
    %184 = arith.addf %183, %182 : vector<2x32xf32>
    %185 = arith.divf %183, %184 : vector<2x32xf32>
    %186 = vector.extract_strided_slice %179 {offsets = [0, 32], sizes = [2, 32], strides = [1, 1]} : vector<2x128xf32> to vector<2x32xf32>
    %187 = arith.negf %186 : vector<2x32xf32>
    %188 = math.exp %187 : vector<2x32xf32>
    %cst_35 = arith.constant 1.000000e+00 : f32
    %189 = vector.broadcast %cst_35 : f32 to vector<2x32xf32>
    %190 = arith.addf %189, %188 : vector<2x32xf32>
    %191 = arith.divf %189, %190 : vector<2x32xf32>
    %192 = vector.extract_strided_slice %179 {offsets = [0, 64], sizes = [2, 32], strides = [1, 1]} : vector<2x128xf32> to vector<2x32xf32>
    %193 = math.tanh %192 : vector<2x32xf32>
    %194 = vector.extract_strided_slice %179 {offsets = [0, 96], sizes = [2, 32], strides = [1, 1]} : vector<2x128xf32> to vector<2x32xf32>
    %195 = arith.negf %194 : vector<2x32xf32>
    %196 = math.exp %195 : vector<2x32xf32>
    %cst_36 = arith.constant 1.000000e+00 : f32
    %197 = vector.broadcast %cst_36 : f32 to vector<2x32xf32>
    %198 = arith.addf %197, %196 : vector<2x32xf32>
    %199 = arith.divf %197, %198 : vector<2x32xf32>
    %200 = arith.mulf %191, %174 : vector<2x32xf32>
    %201 = arith.mulf %185, %193 : vector<2x32xf32>
    %202 = arith.addf %200, %201 : vector<2x32xf32>
    %203 = math.tanh %202 : vector<2x32xf32>
    %204 = arith.mulf %199, %203 : vector<2x32xf32>
    %205 = vector.extract_strided_slice %6 {offsets = [14, 0], sizes = [2, 128], strides = [1, 1]} : vector<16x128xf32> to vector<2x128xf32>
    %cst_37 = arith.constant dense<0.000000e+00> : vector<2x128xf32>
    %206 = tpu.matmul %204, %2, %cst_37 {dimension_numbers = #tpu.dot_dimension_numbers<[1], [0], [0], [1], [0, 0, 1, 1], [], []>} : vector<2x32xf32>, vector<32x128xf32>, vector<2x128xf32> -> vector<2x128xf32>
    %207 = arith.addf %205, %206 : vector<2x128xf32>
    %208 = vector.extract_strided_slice %207 {offsets = [0, 0], sizes = [2, 32], strides = [1, 1]} : vector<2x128xf32> to vector<2x32xf32>
    %209 = arith.negf %208 : vector<2x32xf32>
    %210 = math.exp %209 : vector<2x32xf32>
    %cst_38 = arith.constant 1.000000e+00 : f32
    %211 = vector.broadcast %cst_38 : f32 to vector<2x32xf32>
    %212 = arith.addf %211, %210 : vector<2x32xf32>
    %213 = arith.divf %211, %212 : vector<2x32xf32>
    %214 = vector.extract_strided_slice %207 {offsets = [0, 32], sizes = [2, 32], strides = [1, 1]} : vector<2x128xf32> to vector<2x32xf32>
    %215 = arith.negf %214 : vector<2x32xf32>
    %216 = math.exp %215 : vector<2x32xf32>
    %cst_39 = arith.constant 1.000000e+00 : f32
    %217 = vector.broadcast %cst_39 : f32 to vector<2x32xf32>
    %218 = arith.addf %217, %216 : vector<2x32xf32>
    %219 = arith.divf %217, %218 : vector<2x32xf32>
    %220 = vector.extract_strided_slice %207 {offsets = [0, 64], sizes = [2, 32], strides = [1, 1]} : vector<2x128xf32> to vector<2x32xf32>
    %221 = math.tanh %220 : vector<2x32xf32>
    %222 = vector.extract_strided_slice %207 {offsets = [0, 96], sizes = [2, 32], strides = [1, 1]} : vector<2x128xf32> to vector<2x32xf32>
    %223 = arith.negf %222 : vector<2x32xf32>
    %224 = math.exp %223 : vector<2x32xf32>
    %cst_40 = arith.constant 1.000000e+00 : f32
    %225 = vector.broadcast %cst_40 : f32 to vector<2x32xf32>
    %226 = arith.addf %225, %224 : vector<2x32xf32>
    %227 = arith.divf %225, %226 : vector<2x32xf32>
    %228 = arith.mulf %219, %202 : vector<2x32xf32>
    %229 = arith.mulf %213, %221 : vector<2x32xf32>
    %230 = arith.addf %228, %229 : vector<2x32xf32>
    %231 = math.tanh %230 : vector<2x32xf32>
    %232 = arith.mulf %227, %231 : vector<2x32xf32>
    %233 = tpu.concatenate %36, %64, %92, %120, %148, %176, %204, %232 in 0 : vector<2x32xf32>, vector<2x32xf32>, vector<2x32xf32>, vector<2x32xf32>, vector<2x32xf32>, vector<2x32xf32>, vector<2x32xf32>, vector<2x32xf32> -> vector<16x32xf32>
    %c0_41 = arith.constant 0 : index
    %c0_42 = arith.constant 0 : index
    %234 = vector.load %arg4[%c0_41, %c0_42] : memref<32x128xf32, #tpu.memory_space<vmem>>, vector<32x128xf32>
    %c0_43 = arith.constant 0 : index
    %c0_44 = arith.constant 0 : index
    %235 = vector.load %arg5[%c0_43, %c0_44] : memref<32x128xf32, #tpu.memory_space<vmem>>, vector<32x128xf32>
    %c0_45 = arith.constant 0 : index
    %c0_46 = arith.constant 0 : index
    %236 = vector.load %arg6[%c0_45, %c0_46] : memref<1x128xf32, #tpu.memory_space<vmem>>, vector<1x128xf32>
    %cst_47 = arith.constant dense<0.000000e+00> : vector<16x128xf32>
    %237 = tpu.matmul %233, %234, %cst_47 {dimension_numbers = #tpu.dot_dimension_numbers<[1], [0], [0], [1], [0, 0, 1, 1], [], []>} : vector<16x32xf32>, vector<32x128xf32>, vector<16x128xf32> -> vector<16x128xf32>
    %238 = vector.broadcast %236 : vector<1x128xf32> to vector<16x128xf32>
    %239 = arith.addf %237, %238 : vector<16x128xf32>
    %cst_48 = arith.constant 0.000000e+00 : f32
    %240 = vector.broadcast %cst_48 : f32 to vector<2x32xf32>
    %cst_49 = arith.constant 0.000000e+00 : f32
    %241 = vector.broadcast %cst_49 : f32 to vector<2x32xf32>
    %242 = vector.extract_strided_slice %239 {offsets = [0, 0], sizes = [2, 128], strides = [1, 1]} : vector<16x128xf32> to vector<2x128xf32>
    %cst_50 = arith.constant dense<0.000000e+00> : vector<2x128xf32>
    %243 = tpu.matmul %240, %235, %cst_50 {dimension_numbers = #tpu.dot_dimension_numbers<[1], [0], [0], [1], [0, 0, 1, 1], [], []>} : vector<2x32xf32>, vector<32x128xf32>, vector<2x128xf32> -> vector<2x128xf32>
    %244 = arith.addf %242, %243 : vector<2x128xf32>
    %245 = vector.extract_strided_slice %244 {offsets = [0, 0], sizes = [2, 32], strides = [1, 1]} : vector<2x128xf32> to vector<2x32xf32>
    %246 = arith.negf %245 : vector<2x32xf32>
    %247 = math.exp %246 : vector<2x32xf32>
    %cst_51 = arith.constant 1.000000e+00 : f32
    %248 = vector.broadcast %cst_51 : f32 to vector<2x32xf32>
    %249 = arith.addf %248, %247 : vector<2x32xf32>
    %250 = arith.divf %248, %249 : vector<2x32xf32>
    %251 = vector.extract_strided_slice %244 {offsets = [0, 32], sizes = [2, 32], strides = [1, 1]} : vector<2x128xf32> to vector<2x32xf32>
    %252 = arith.negf %251 : vector<2x32xf32>
    %253 = math.exp %252 : vector<2x32xf32>
    %cst_52 = arith.constant 1.000000e+00 : f32
    %254 = vector.broadcast %cst_52 : f32 to vector<2x32xf32>
    %255 = arith.addf %254, %253 : vector<2x32xf32>
    %256 = arith.divf %254, %255 : vector<2x32xf32>
    %257 = vector.extract_strided_slice %244 {offsets = [0, 64], sizes = [2, 32], strides = [1, 1]} : vector<2x128xf32> to vector<2x32xf32>
    %258 = math.tanh %257 : vector<2x32xf32>
    %259 = vector.extract_strided_slice %244 {offsets = [0, 96], sizes = [2, 32], strides = [1, 1]} : vector<2x128xf32> to vector<2x32xf32>
    %260 = arith.negf %259 : vector<2x32xf32>
    %261 = math.exp %260 : vector<2x32xf32>
    %cst_53 = arith.constant 1.000000e+00 : f32
    %262 = vector.broadcast %cst_53 : f32 to vector<2x32xf32>
    %263 = arith.addf %262, %261 : vector<2x32xf32>
    %264 = arith.divf %262, %263 : vector<2x32xf32>
    %265 = arith.mulf %256, %241 : vector<2x32xf32>
    %266 = arith.mulf %250, %258 : vector<2x32xf32>
    %267 = arith.addf %265, %266 : vector<2x32xf32>
    %268 = math.tanh %267 : vector<2x32xf32>
    %269 = arith.mulf %264, %268 : vector<2x32xf32>
    %270 = vector.extract_strided_slice %239 {offsets = [2, 0], sizes = [2, 128], strides = [1, 1]} : vector<16x128xf32> to vector<2x128xf32>
    %cst_54 = arith.constant dense<0.000000e+00> : vector<2x128xf32>
    %271 = tpu.matmul %269, %235, %cst_54 {dimension_numbers = #tpu.dot_dimension_numbers<[1], [0], [0], [1], [0, 0, 1, 1], [], []>} : vector<2x32xf32>, vector<32x128xf32>, vector<2x128xf32> -> vector<2x128xf32>
    %272 = arith.addf %270, %271 : vector<2x128xf32>
    %273 = vector.extract_strided_slice %272 {offsets = [0, 0], sizes = [2, 32], strides = [1, 1]} : vector<2x128xf32> to vector<2x32xf32>
    %274 = arith.negf %273 : vector<2x32xf32>
    %275 = math.exp %274 : vector<2x32xf32>
    %cst_55 = arith.constant 1.000000e+00 : f32
    %276 = vector.broadcast %cst_55 : f32 to vector<2x32xf32>
    %277 = arith.addf %276, %275 : vector<2x32xf32>
    %278 = arith.divf %276, %277 : vector<2x32xf32>
    %279 = vector.extract_strided_slice %272 {offsets = [0, 32], sizes = [2, 32], strides = [1, 1]} : vector<2x128xf32> to vector<2x32xf32>
    %280 = arith.negf %279 : vector<2x32xf32>
    %281 = math.exp %280 : vector<2x32xf32>
    %cst_56 = arith.constant 1.000000e+00 : f32
    %282 = vector.broadcast %cst_56 : f32 to vector<2x32xf32>
    %283 = arith.addf %282, %281 : vector<2x32xf32>
    %284 = arith.divf %282, %283 : vector<2x32xf32>
    %285 = vector.extract_strided_slice %272 {offsets = [0, 64], sizes = [2, 32], strides = [1, 1]} : vector<2x128xf32> to vector<2x32xf32>
    %286 = math.tanh %285 : vector<2x32xf32>
    %287 = vector.extract_strided_slice %272 {offsets = [0, 96], sizes = [2, 32], strides = [1, 1]} : vector<2x128xf32> to vector<2x32xf32>
    %288 = arith.negf %287 : vector<2x32xf32>
    %289 = math.exp %288 : vector<2x32xf32>
    %cst_57 = arith.constant 1.000000e+00 : f32
    %290 = vector.broadcast %cst_57 : f32 to vector<2x32xf32>
    %291 = arith.addf %290, %289 : vector<2x32xf32>
    %292 = arith.divf %290, %291 : vector<2x32xf32>
    %293 = arith.mulf %284, %267 : vector<2x32xf32>
    %294 = arith.mulf %278, %286 : vector<2x32xf32>
    %295 = arith.addf %293, %294 : vector<2x32xf32>
    %296 = math.tanh %295 : vector<2x32xf32>
    %297 = arith.mulf %292, %296 : vector<2x32xf32>
    %298 = vector.extract_strided_slice %239 {offsets = [4, 0], sizes = [2, 128], strides = [1, 1]} : vector<16x128xf32> to vector<2x128xf32>
    %cst_58 = arith.constant dense<0.000000e+00> : vector<2x128xf32>
    %299 = tpu.matmul %297, %235, %cst_58 {dimension_numbers = #tpu.dot_dimension_numbers<[1], [0], [0], [1], [0, 0, 1, 1], [], []>} : vector<2x32xf32>, vector<32x128xf32>, vector<2x128xf32> -> vector<2x128xf32>
    %300 = arith.addf %298, %299 : vector<2x128xf32>
    %301 = vector.extract_strided_slice %300 {offsets = [0, 0], sizes = [2, 32], strides = [1, 1]} : vector<2x128xf32> to vector<2x32xf32>
    %302 = arith.negf %301 : vector<2x32xf32>
    %303 = math.exp %302 : vector<2x32xf32>
    %cst_59 = arith.constant 1.000000e+00 : f32
    %304 = vector.broadcast %cst_59 : f32 to vector<2x32xf32>
    %305 = arith.addf %304, %303 : vector<2x32xf32>
    %306 = arith.divf %304, %305 : vector<2x32xf32>
    %307 = vector.extract_strided_slice %300 {offsets = [0, 32], sizes = [2, 32], strides = [1, 1]} : vector<2x128xf32> to vector<2x32xf32>
    %308 = arith.negf %307 : vector<2x32xf32>
    %309 = math.exp %308 : vector<2x32xf32>
    %cst_60 = arith.constant 1.000000e+00 : f32
    %310 = vector.broadcast %cst_60 : f32 to vector<2x32xf32>
    %311 = arith.addf %310, %309 : vector<2x32xf32>
    %312 = arith.divf %310, %311 : vector<2x32xf32>
    %313 = vector.extract_strided_slice %300 {offsets = [0, 64], sizes = [2, 32], strides = [1, 1]} : vector<2x128xf32> to vector<2x32xf32>
    %314 = math.tanh %313 : vector<2x32xf32>
    %315 = vector.extract_strided_slice %300 {offsets = [0, 96], sizes = [2, 32], strides = [1, 1]} : vector<2x128xf32> to vector<2x32xf32>
    %316 = arith.negf %315 : vector<2x32xf32>
    %317 = math.exp %316 : vector<2x32xf32>
    %cst_61 = arith.constant 1.000000e+00 : f32
    %318 = vector.broadcast %cst_61 : f32 to vector<2x32xf32>
    %319 = arith.addf %318, %317 : vector<2x32xf32>
    %320 = arith.divf %318, %319 : vector<2x32xf32>
    %321 = arith.mulf %312, %295 : vector<2x32xf32>
    %322 = arith.mulf %306, %314 : vector<2x32xf32>
    %323 = arith.addf %321, %322 : vector<2x32xf32>
    %324 = math.tanh %323 : vector<2x32xf32>
    %325 = arith.mulf %320, %324 : vector<2x32xf32>
    %326 = vector.extract_strided_slice %239 {offsets = [6, 0], sizes = [2, 128], strides = [1, 1]} : vector<16x128xf32> to vector<2x128xf32>
    %cst_62 = arith.constant dense<0.000000e+00> : vector<2x128xf32>
    %327 = tpu.matmul %325, %235, %cst_62 {dimension_numbers = #tpu.dot_dimension_numbers<[1], [0], [0], [1], [0, 0, 1, 1], [], []>} : vector<2x32xf32>, vector<32x128xf32>, vector<2x128xf32> -> vector<2x128xf32>
    %328 = arith.addf %326, %327 : vector<2x128xf32>
    %329 = vector.extract_strided_slice %328 {offsets = [0, 0], sizes = [2, 32], strides = [1, 1]} : vector<2x128xf32> to vector<2x32xf32>
    %330 = arith.negf %329 : vector<2x32xf32>
    %331 = math.exp %330 : vector<2x32xf32>
    %cst_63 = arith.constant 1.000000e+00 : f32
    %332 = vector.broadcast %cst_63 : f32 to vector<2x32xf32>
    %333 = arith.addf %332, %331 : vector<2x32xf32>
    %334 = arith.divf %332, %333 : vector<2x32xf32>
    %335 = vector.extract_strided_slice %328 {offsets = [0, 32], sizes = [2, 32], strides = [1, 1]} : vector<2x128xf32> to vector<2x32xf32>
    %336 = arith.negf %335 : vector<2x32xf32>
    %337 = math.exp %336 : vector<2x32xf32>
    %cst_64 = arith.constant 1.000000e+00 : f32
    %338 = vector.broadcast %cst_64 : f32 to vector<2x32xf32>
    %339 = arith.addf %338, %337 : vector<2x32xf32>
    %340 = arith.divf %338, %339 : vector<2x32xf32>
    %341 = vector.extract_strided_slice %328 {offsets = [0, 64], sizes = [2, 32], strides = [1, 1]} : vector<2x128xf32> to vector<2x32xf32>
    %342 = math.tanh %341 : vector<2x32xf32>
    %343 = vector.extract_strided_slice %328 {offsets = [0, 96], sizes = [2, 32], strides = [1, 1]} : vector<2x128xf32> to vector<2x32xf32>
    %344 = arith.negf %343 : vector<2x32xf32>
    %345 = math.exp %344 : vector<2x32xf32>
    %cst_65 = arith.constant 1.000000e+00 : f32
    %346 = vector.broadcast %cst_65 : f32 to vector<2x32xf32>
    %347 = arith.addf %346, %345 : vector<2x32xf32>
    %348 = arith.divf %346, %347 : vector<2x32xf32>
    %349 = arith.mulf %340, %323 : vector<2x32xf32>
    %350 = arith.mulf %334, %342 : vector<2x32xf32>
    %351 = arith.addf %349, %350 : vector<2x32xf32>
    %352 = math.tanh %351 : vector<2x32xf32>
    %353 = arith.mulf %348, %352 : vector<2x32xf32>
    %354 = vector.extract_strided_slice %239 {offsets = [8, 0], sizes = [2, 128], strides = [1, 1]} : vector<16x128xf32> to vector<2x128xf32>
    %cst_66 = arith.constant dense<0.000000e+00> : vector<2x128xf32>
    %355 = tpu.matmul %353, %235, %cst_66 {dimension_numbers = #tpu.dot_dimension_numbers<[1], [0], [0], [1], [0, 0, 1, 1], [], []>} : vector<2x32xf32>, vector<32x128xf32>, vector<2x128xf32> -> vector<2x128xf32>
    %356 = arith.addf %354, %355 : vector<2x128xf32>
    %357 = vector.extract_strided_slice %356 {offsets = [0, 0], sizes = [2, 32], strides = [1, 1]} : vector<2x128xf32> to vector<2x32xf32>
    %358 = arith.negf %357 : vector<2x32xf32>
    %359 = math.exp %358 : vector<2x32xf32>
    %cst_67 = arith.constant 1.000000e+00 : f32
    %360 = vector.broadcast %cst_67 : f32 to vector<2x32xf32>
    %361 = arith.addf %360, %359 : vector<2x32xf32>
    %362 = arith.divf %360, %361 : vector<2x32xf32>
    %363 = vector.extract_strided_slice %356 {offsets = [0, 32], sizes = [2, 32], strides = [1, 1]} : vector<2x128xf32> to vector<2x32xf32>
    %364 = arith.negf %363 : vector<2x32xf32>
    %365 = math.exp %364 : vector<2x32xf32>
    %cst_68 = arith.constant 1.000000e+00 : f32
    %366 = vector.broadcast %cst_68 : f32 to vector<2x32xf32>
    %367 = arith.addf %366, %365 : vector<2x32xf32>
    %368 = arith.divf %366, %367 : vector<2x32xf32>
    %369 = vector.extract_strided_slice %356 {offsets = [0, 64], sizes = [2, 32], strides = [1, 1]} : vector<2x128xf32> to vector<2x32xf32>
    %370 = math.tanh %369 : vector<2x32xf32>
    %371 = vector.extract_strided_slice %356 {offsets = [0, 96], sizes = [2, 32], strides = [1, 1]} : vector<2x128xf32> to vector<2x32xf32>
    %372 = arith.negf %371 : vector<2x32xf32>
    %373 = math.exp %372 : vector<2x32xf32>
    %cst_69 = arith.constant 1.000000e+00 : f32
    %374 = vector.broadcast %cst_69 : f32 to vector<2x32xf32>
    %375 = arith.addf %374, %373 : vector<2x32xf32>
    %376 = arith.divf %374, %375 : vector<2x32xf32>
    %377 = arith.mulf %368, %351 : vector<2x32xf32>
    %378 = arith.mulf %362, %370 : vector<2x32xf32>
    %379 = arith.addf %377, %378 : vector<2x32xf32>
    %380 = math.tanh %379 : vector<2x32xf32>
    %381 = arith.mulf %376, %380 : vector<2x32xf32>
    %382 = vector.extract_strided_slice %239 {offsets = [10, 0], sizes = [2, 128], strides = [1, 1]} : vector<16x128xf32> to vector<2x128xf32>
    %cst_70 = arith.constant dense<0.000000e+00> : vector<2x128xf32>
    %383 = tpu.matmul %381, %235, %cst_70 {dimension_numbers = #tpu.dot_dimension_numbers<[1], [0], [0], [1], [0, 0, 1, 1], [], []>} : vector<2x32xf32>, vector<32x128xf32>, vector<2x128xf32> -> vector<2x128xf32>
    %384 = arith.addf %382, %383 : vector<2x128xf32>
    %385 = vector.extract_strided_slice %384 {offsets = [0, 0], sizes = [2, 32], strides = [1, 1]} : vector<2x128xf32> to vector<2x32xf32>
    %386 = arith.negf %385 : vector<2x32xf32>
    %387 = math.exp %386 : vector<2x32xf32>
    %cst_71 = arith.constant 1.000000e+00 : f32
    %388 = vector.broadcast %cst_71 : f32 to vector<2x32xf32>
    %389 = arith.addf %388, %387 : vector<2x32xf32>
    %390 = arith.divf %388, %389 : vector<2x32xf32>
    %391 = vector.extract_strided_slice %384 {offsets = [0, 32], sizes = [2, 32], strides = [1, 1]} : vector<2x128xf32> to vector<2x32xf32>
    %392 = arith.negf %391 : vector<2x32xf32>
    %393 = math.exp %392 : vector<2x32xf32>
    %cst_72 = arith.constant 1.000000e+00 : f32
    %394 = vector.broadcast %cst_72 : f32 to vector<2x32xf32>
    %395 = arith.addf %394, %393 : vector<2x32xf32>
    %396 = arith.divf %394, %395 : vector<2x32xf32>
    %397 = vector.extract_strided_slice %384 {offsets = [0, 64], sizes = [2, 32], strides = [1, 1]} : vector<2x128xf32> to vector<2x32xf32>
    %398 = math.tanh %397 : vector<2x32xf32>
    %399 = vector.extract_strided_slice %384 {offsets = [0, 96], sizes = [2, 32], strides = [1, 1]} : vector<2x128xf32> to vector<2x32xf32>
    %400 = arith.negf %399 : vector<2x32xf32>
    %401 = math.exp %400 : vector<2x32xf32>
    %cst_73 = arith.constant 1.000000e+00 : f32
    %402 = vector.broadcast %cst_73 : f32 to vector<2x32xf32>
    %403 = arith.addf %402, %401 : vector<2x32xf32>
    %404 = arith.divf %402, %403 : vector<2x32xf32>
    %405 = arith.mulf %396, %379 : vector<2x32xf32>
    %406 = arith.mulf %390, %398 : vector<2x32xf32>
    %407 = arith.addf %405, %406 : vector<2x32xf32>
    %408 = math.tanh %407 : vector<2x32xf32>
    %409 = arith.mulf %404, %408 : vector<2x32xf32>
    %410 = vector.extract_strided_slice %239 {offsets = [12, 0], sizes = [2, 128], strides = [1, 1]} : vector<16x128xf32> to vector<2x128xf32>
    %cst_74 = arith.constant dense<0.000000e+00> : vector<2x128xf32>
    %411 = tpu.matmul %409, %235, %cst_74 {dimension_numbers = #tpu.dot_dimension_numbers<[1], [0], [0], [1], [0, 0, 1, 1], [], []>} : vector<2x32xf32>, vector<32x128xf32>, vector<2x128xf32> -> vector<2x128xf32>
    %412 = arith.addf %410, %411 : vector<2x128xf32>
    %413 = vector.extract_strided_slice %412 {offsets = [0, 0], sizes = [2, 32], strides = [1, 1]} : vector<2x128xf32> to vector<2x32xf32>
    %414 = arith.negf %413 : vector<2x32xf32>
    %415 = math.exp %414 : vector<2x32xf32>
    %cst_75 = arith.constant 1.000000e+00 : f32
    %416 = vector.broadcast %cst_75 : f32 to vector<2x32xf32>
    %417 = arith.addf %416, %415 : vector<2x32xf32>
    %418 = arith.divf %416, %417 : vector<2x32xf32>
    %419 = vector.extract_strided_slice %412 {offsets = [0, 32], sizes = [2, 32], strides = [1, 1]} : vector<2x128xf32> to vector<2x32xf32>
    %420 = arith.negf %419 : vector<2x32xf32>
    %421 = math.exp %420 : vector<2x32xf32>
    %cst_76 = arith.constant 1.000000e+00 : f32
    %422 = vector.broadcast %cst_76 : f32 to vector<2x32xf32>
    %423 = arith.addf %422, %421 : vector<2x32xf32>
    %424 = arith.divf %422, %423 : vector<2x32xf32>
    %425 = vector.extract_strided_slice %412 {offsets = [0, 64], sizes = [2, 32], strides = [1, 1]} : vector<2x128xf32> to vector<2x32xf32>
    %426 = math.tanh %425 : vector<2x32xf32>
    %427 = vector.extract_strided_slice %412 {offsets = [0, 96], sizes = [2, 32], strides = [1, 1]} : vector<2x128xf32> to vector<2x32xf32>
    %428 = arith.negf %427 : vector<2x32xf32>
    %429 = math.exp %428 : vector<2x32xf32>
    %cst_77 = arith.constant 1.000000e+00 : f32
    %430 = vector.broadcast %cst_77 : f32 to vector<2x32xf32>
    %431 = arith.addf %430, %429 : vector<2x32xf32>
    %432 = arith.divf %430, %431 : vector<2x32xf32>
    %433 = arith.mulf %424, %407 : vector<2x32xf32>
    %434 = arith.mulf %418, %426 : vector<2x32xf32>
    %435 = arith.addf %433, %434 : vector<2x32xf32>
    %436 = math.tanh %435 : vector<2x32xf32>
    %437 = arith.mulf %432, %436 : vector<2x32xf32>
    %438 = vector.extract_strided_slice %239 {offsets = [14, 0], sizes = [2, 128], strides = [1, 1]} : vector<16x128xf32> to vector<2x128xf32>
    %cst_78 = arith.constant dense<0.000000e+00> : vector<2x128xf32>
    %439 = tpu.matmul %437, %235, %cst_78 {dimension_numbers = #tpu.dot_dimension_numbers<[1], [0], [0], [1], [0, 0, 1, 1], [], []>} : vector<2x32xf32>, vector<32x128xf32>, vector<2x128xf32> -> vector<2x128xf32>
    %440 = arith.addf %438, %439 : vector<2x128xf32>
    %441 = vector.extract_strided_slice %440 {offsets = [0, 0], sizes = [2, 32], strides = [1, 1]} : vector<2x128xf32> to vector<2x32xf32>
    %442 = arith.negf %441 : vector<2x32xf32>
    %443 = math.exp %442 : vector<2x32xf32>
    %cst_79 = arith.constant 1.000000e+00 : f32
    %444 = vector.broadcast %cst_79 : f32 to vector<2x32xf32>
    %445 = arith.addf %444, %443 : vector<2x32xf32>
    %446 = arith.divf %444, %445 : vector<2x32xf32>
    %447 = vector.extract_strided_slice %440 {offsets = [0, 32], sizes = [2, 32], strides = [1, 1]} : vector<2x128xf32> to vector<2x32xf32>
    %448 = arith.negf %447 : vector<2x32xf32>
    %449 = math.exp %448 : vector<2x32xf32>
    %cst_80 = arith.constant 1.000000e+00 : f32
    %450 = vector.broadcast %cst_80 : f32 to vector<2x32xf32>
    %451 = arith.addf %450, %449 : vector<2x32xf32>
    %452 = arith.divf %450, %451 : vector<2x32xf32>
    %453 = vector.extract_strided_slice %440 {offsets = [0, 64], sizes = [2, 32], strides = [1, 1]} : vector<2x128xf32> to vector<2x32xf32>
    %454 = math.tanh %453 : vector<2x32xf32>
    %455 = vector.extract_strided_slice %440 {offsets = [0, 96], sizes = [2, 32], strides = [1, 1]} : vector<2x128xf32> to vector<2x32xf32>
    %456 = arith.negf %455 : vector<2x32xf32>
    %457 = math.exp %456 : vector<2x32xf32>
    %cst_81 = arith.constant 1.000000e+00 : f32
    %458 = vector.broadcast %cst_81 : f32 to vector<2x32xf32>
    %459 = arith.addf %458, %457 : vector<2x32xf32>
    %460 = arith.divf %458, %459 : vector<2x32xf32>
    %461 = arith.mulf %452, %435 : vector<2x32xf32>
    %462 = arith.mulf %446, %454 : vector<2x32xf32>
    %463 = arith.addf %461, %462 : vector<2x32xf32>
    %464 = math.tanh %463 : vector<2x32xf32>
    %465 = arith.mulf %460, %464 : vector<2x32xf32>
    %c0_82 = arith.constant 0 : index
    %c0_83 = arith.constant 0 : index
    %466 = vector.load %arg7[%c0_82, %c0_83] : memref<32x1xf32, #tpu.memory_space<vmem>>, vector<32x1xf32>
    %cst_84 = arith.constant dense<0.000000e+00> : vector<2x1xf32>
    %467 = tpu.matmul %465, %466, %cst_84 {dimension_numbers = #tpu.dot_dimension_numbers<[1], [0], [0], [1], [0, 0, 1, 1], [], []>} : vector<2x32xf32>, vector<32x1xf32>, vector<2x1xf32> -> vector<2x1xf32>
    %c0_85 = arith.constant 0 : index
    %c0_86 = arith.constant 0 : index
    %468 = vector.load %arg8[%c0_85, %c0_86] : memref<1x1xf32, #tpu.memory_space<vmem>>, vector<1x1xf32>
    %469 = vector.broadcast %468 : vector<1x1xf32> to vector<2x1xf32>
    %470 = arith.addf %467, %469 : vector<2x1xf32>
    %c0_87 = arith.constant 0 : index
    %c0_88 = arith.constant 0 : index
    %471 = vector.load %arg9[%c0_87, %c0_88] : memref<2x1xf32, #tpu.memory_space<vmem>>, vector<2x1xf32>
    tpu.vector_store %arg9[%c0_87, %c0_88], %470 {strides = array<i32>} : memref<2x1xf32, #tpu.memory_space<vmem>>, vector<2x1xf32>,
    return
  }
}

</mosaic_0001>

<llo_original>
// kernel: lstm_forward.1
$region0: #{lstm_forward.1}
  #allocation0 [shape = 'u32[]', space=smem, size = 0x4, offset = 0x4, fixed_abs, tag = 'smem constant byte address 0x4 - core index']
  #allocation1 [shape = 'u32[144,128]{1,0:T(1,128)}', space=vmem, size = 0x12000, scoped, tag = 'internal scratch']
  #allocation2 [shape = 'f32[1,1]{1,0:T(1,128)S(1)}', space=vmem, size = 0x200, scoped, tag = 'scoped memory for lstm_forward.1']
  %s0 = inlined_call_operand.vmem [shape: f32[16,16], index: 0, kind: input, shape index: {}]
  %s1 = inlined_call_operand.hbm [shape: f32[16,128], index: 1, kind: input, shape index: {}]
  %s2 = inlined_call_operand.vmem [shape: f32[32,128], index: 2, kind: input, shape index: {}]
  %s3 = inlined_call_operand.vmem [shape: f32[1,128], index: 3, kind: input, shape index: {}]
  %s4 = inlined_call_operand.vmem [shape: f32[32,128], index: 4, kind: input, shape index: {}]
  %s5 = inlined_call_operand.hbm [shape: f32[32,128], index: 5, kind: input, shape index: {}]
  %s6 = inlined_call_operand.vmem [shape: f32[1,128], index: 6, kind: input, shape index: {}]
  %s7 = inlined_call_operand.vmem [shape: f32[32,1], index: 7, kind: input, shape index: {}]
  %s8 = inlined_call_operand.<no memory space> [shape: f32[1,1], index: 8, kind: input, shape index: {}]
  %s9 = inlined_call_operand.vmem [shape: f32[2,1], index: 9, kind: output, shape index: {}]
  %s10 = sld [smem:[#allocation0]]
  $region54: #{lstm_forward.1} parent=0
    _
  %s12 = ssub.s32 1, %s10
  %s13 = scalar_select 0, %s12, %s10
  %v14 = vstv %s8
  %15 = vst [vmem:[#allocation2] sm:$0x1] %v14
  $region1: #{lstm_forward.1} parent=0
    #allocation3 [shape = 'u8[8192]{0}', space=vmem, size = 0x2000, scoped, tag = 'input window, operand 1, single buffered']
    #allocation4 [shape = 's32[1]{0}', space=sflag, size = 0x4, scoped, tag = 'scoped memory for lstm_forward.1']
    #allocation5 [shape = 'u8[16384]{0}', space=vmem, size = 0x4000, scoped, tag = 'input window, operand 5, single buffered']
    #allocation6 [shape = 's32[1]{0}', space=sflag, size = 0x4, scoped, tag = 'scoped memory for lstm_forward.1']
    %16 = vsyncpa [#allocation4], 0
    %17 = vsyncpa [#allocation6], 0
    // Predicated region
    $region2: #{lstm_forward.1} parent=1 // pred_check
      _
    $region3: #{lstm_forward.1} parent=1 // pred_check_branch
      %19 = sbr.rel (0) target = $region5
    $region4: #{lstm_forward.1} parent=1 // pred_region
      _
    $region5: #{lstm_forward.1} parent=1 // pred_fallthru
      _
    // Predicated region
    $region6: #{lstm_forward.1} parent=1 // pred_check
      _
    $region7: #{lstm_forward.1} parent=1 // pred_check_branch
      %21 = sbr.rel (0) target = $region9
    $region8: #{lstm_forward.1} parent=1 // pred_region
      %s23 = ssub.s32 256, 256
      %24 = vsyncadd [#allocation4], %s23
      %s25 = sshll.u32 [#allocation3], 4
      %s26 = int_to_ptr.vmem [resolvable:$true] %s25
      %31 = dma.hbm_to_vmem [thread:$0]  %s1, 256, %s26, [#allocation4], 128, 128, 8
    $region9: #{lstm_forward.1} parent=1 // pred_fallthru
      _
    // Predicated region
    $region10: #{lstm_forward.1} parent=1 // pred_check
      _
    $region11: #{lstm_forward.1} parent=1 // pred_check_branch
      %33 = sbr.rel (0) target = $region13
    $region12: #{lstm_forward.1} parent=1 // pred_region
      _
    $region13: #{lstm_forward.1} parent=1 // pred_fallthru
      _
    // Predicated region
    $region14: #{lstm_forward.1} parent=1 // pred_check
      _
    $region15: #{lstm_forward.1} parent=1 // pred_check_branch
      %35 = sbr.rel (0) target = $region17
    $region16: #{lstm_forward.1} parent=1 // pred_region
      _
    $region17: #{lstm_forward.1} parent=1 // pred_fallthru
      _
    // Predicated region
    $region18: #{lstm_forward.1} parent=1 // pred_check
      _
    $region19: #{lstm_forward.1} parent=1 // pred_check_branch
      %37 = sbr.rel (0) target = $region21
    $region20: #{lstm_forward.1} parent=1 // pred_region
      _
    $region21: #{lstm_forward.1} parent=1 // pred_fallthru
      _
    // Predicated region
    $region22: #{lstm_forward.1} parent=1 // pred_check
      _
    $region23: #{lstm_forward.1} parent=1 // pred_check_branch
      %39 = sbr.rel (0) target = $region25
    $region24: #{lstm_forward.1} parent=1 // pred_region
      %s41 = ssub.s32 512, 512
      %42 = vsyncadd [#allocation6], %s41
      %s43 = sshll.u32 [#allocation5], 4
      %s44 = int_to_ptr.vmem [resolvable:$true] %s43
      %49 = dma.hbm_to_vmem [thread:$0]  %s5, 512, %s44, [#allocation6], 128, 128, 8
    $region25: #{lstm_forward.1} parent=1 // pred_fallthru
      _
    // Predicated region
    $region26: #{lstm_forward.1} parent=1 // pred_check
      _
    $region27: #{lstm_forward.1} parent=1 // pred_check_branch
      %51 = sbr.rel (0) target = $region29
    $region28: #{lstm_forward.1} parent=1 // pred_region
      _
    $region29: #{lstm_forward.1} parent=1 // pred_fallthru
      _
    // Predicated region
    $region30: #{lstm_forward.1} parent=1 // pred_check
      _
    $region31: #{lstm_forward.1} parent=1 // pred_check_branch
      %53 = sbr.rel (0) target = $region33
    $region32: #{lstm_forward.1} parent=1 // pred_region
      _
    $region33: #{lstm_forward.1} parent=1 // pred_fallthru
      _
    // Predicated region
    $region34: #{lstm_forward.1} parent=1 // pred_check
      _
    $region35: #{lstm_forward.1} parent=1 // pred_check_branch
      %55 = sbr.rel (0) target = $region37
    $region36: #{lstm_forward.1} parent=1 // pred_region
      _
    $region37: #{lstm_forward.1} parent=1 // pred_fallthru
      _
    // Predicated region
    $region38: #{lstm_forward.1} parent=1 // pred_check
      _
    $region39: #{lstm_forward.1} parent=1 // pred_check_branch
      %57 = sbr.rel (0) target = $region41
    $region40: #{lstm_forward.1} parent=1 // pred_region
      %58 = dma.done [#allocation4], 256
    $region41: #{lstm_forward.1} parent=1 // pred_fallthru
      _
    // Predicated region
    $region42: #{lstm_forward.1} parent=1 // pred_check
      _
    $region43: #{lstm_forward.1} parent=1 // pred_check_branch
      %60 = sbr.rel (0) target = $region45
    $region44: #{lstm_forward.1} parent=1 // pred_region
      %61 = dma.done [#allocation6], 512
    $region45: #{lstm_forward.1} parent=1 // pred_fallthru
      _
    %v62 = vld [vmem:[%s0] sm:$0xff]
    %v63 = vld [vmem:[%s0 + $0x8] sm:$0xff]
    %v64 = vld [vmem:[#allocation3] sm:$0xff]
    %v65 = vld [vmem:[#allocation3 + $0x8] sm:$0xff]
    %v66 = vld [vmem:[%s2] sm:$0xff]
    %v67 = vld [vmem:[%s2 + $0x8] sm:$0xff]
    %v68 = vld [vmem:[%s2 + $0x10] sm:$0xff]
    %v69 = vld [vmem:[%s2 + $0x18] sm:$0xff]
    %v70 = vld [vmem:[%s3] sm:$0x1]
    %v72 = vlaneseq
    %v73 = vshrl.u32 %v72, 7
    %v74 = vsub.s32 0, %v73
    %v75 = vrot.slane %v70, %v74
    %vm77 = vcmask 130048
    %v79 = vsel %vm77, %v62, 0
    %v82 = vsel %vm77, %v63, 0
    %84 = vmatprep.subr.mxu0 0.0
    %85 = vmatpush1.msra.mxu0 0.0
    %86 = vmatprep.subr.mxu0 0.0
    %87 = vmatpush1.msra.mxu0 0.0
    %88 = vmatprep.subr.mxu0 0.0
    %89 = vmatpush1.msra.mxu0 0.0
    %90 = vmatprep.subr.mxu0 0.0
    %91 = vmatpush1.msra.mxu0 0.0
    %92 = vmatprep.subr.mxu0 0.0
    %93 = vmatpush1.msra.mxu0 0.0
    %94 = vmatprep.subr.mxu0 0.0
    %95 = vmatpush1.msra.mxu0 0.0
    %96 = vmatprep.subr.mxu0 0.0
    %97 = vmatpush1.msra.mxu0 0.0
    %98 = vmatprep.subr.mxu0 0.0
    %99 = vmatpush1.msra.mxu0 0.0
    %100 = vmatprep.subr.mxu0 0.0
    %101 = vmatpush1.msra.mxu0 0.0
    %102 = vmatprep.subr.mxu0 0.0
    %103 = vmatpush1.msra.mxu0 0.0
    %104 = vmatprep.subr.mxu0 0.0
    %105 = vmatpush1.msra.mxu0 0.0
    %106 = vmatprep.subr.mxu0 0.0
    %107 = vmatpush1.msra.mxu0 0.0
    %108 = vmatprep.subr.mxu0 0.0
    %109 = vmatpush1.msra.mxu0 0.0
    %110 = vmatprep.subr.mxu0 0.0
    %111 = vmatpush1.msra.mxu0 0.0
    %112 = vmatprep.subr.mxu0 0.0
    %113 = vmatpush1.msra.mxu0 %v65
    %114 = vmatprep.subr.mxu0 0.0
    %115 = vmatpush1.msra.mxu0 %v64
    %116 = vmatprep.subr.mxu0 0.0
    %117 = vmatpush2.msra.mxu0 0.0
    %118 = vmatprep.subr.mxu0 0.0
    %119 = vmatpush2.msra.mxu0 0.0
    %120 = vmatprep.subr.mxu0 0.0
    %121 = vmatpush2.msra.mxu0 0.0
    %122 = vmatprep.subr.mxu0 0.0
    %123 = vmatpush2.msra.mxu0 0.0
    %124 = vmatprep.subr.mxu0 0.0
    %125 = vmatpush2.msra.mxu0 0.0
    %126 = vmatprep.subr.mxu0 0.0
    %127 = vmatpush2.msra.mxu0 0.0
    %128 = vmatprep.subr.mxu0 0.0
    %129 = vmatpush2.msra.mxu0 0.0
    %130 = vmatprep.subr.mxu0 0.0
    %131 = vmatpush2.msra.mxu0 0.0
    %132 = vmatprep.subr.mxu0 0.0
    %133 = vmatpush2.msra.mxu0 0.0
    %134 = vmatprep.subr.mxu0 0.0
    %135 = vmatpush2.msra.mxu0 0.0
    %136 = vmatprep.subr.mxu0 0.0
    %137 = vmatpush2.msra.mxu0 0.0
    %138 = vmatprep.subr.mxu0 0.0
    %139 = vmatpush2.msra.mxu0 0.0
    %140 = vmatprep.subr.mxu0 0.0
    %141 = vmatpush2.msra.mxu0 0.0
    %142 = vmatprep.subr.mxu0 0.0
    %143 = vmatpush2.msra.mxu0 0.0
    %144 = vmatprep.subr.mxu0 0.0
    %145 = vmatpush2.msra.mxu0 0.0
    %146 = vmatprep.subr.mxu0 0.0
    %147 = vmatpush2.msra.mxu0 0.0
    %148 = vmatprep.mubr.f32.mxu0 0.0
    %149 = vmatmul.mubr.f32.gmra.mxu0 %v79
    %v150 = vpop.f32.mrf.mxu0
    %v151 = vadd.f32 %v75, %v150
    %v152 = vpop.f32.mrf.mxu0
    %153 = vmatprep.mubr.f32.mxu0 0.0
    %154 = vmatmul.mubr.f32.gmra.mxu0 %v82
    %v155 = vpop.f32.mrf.mxu0
    %v156 = vadd.f32 %v75, %v155
    %v157 = vpop.f32.mrf.mxu0
    %158 = vdwg.mxu0
    %vm159 = vcmask 261120
    %v161 = vsel %vm159, 0.0, 0
    %163 = vmatprep.subr.mxu0 0.0
    %164 = vmatpush1.msra.mxu0 0.0
    %165 = vmatprep.subr.mxu0 0.0
    %166 = vmatpush1.msra.mxu0 0.0
    %167 = vmatprep.subr.mxu0 0.0
    %168 = vmatpush1.msra.mxu0 0.0
    %169 = vmatprep.subr.mxu0 0.0
    %170 = vmatpush1.msra.mxu0 0.0
    %171 = vmatprep.subr.mxu0 0.0
    %172 = vmatpush1.msra.mxu0 0.0
    %173 = vmatprep.subr.mxu0 0.0
    %174 = vmatpush1.msra.mxu0 0.0
    %175 = vmatprep.subr.mxu0 0.0
    %176 = vmatpush1.msra.mxu0 0.0
    %177 = vmatprep.subr.mxu0 0.0
    %178 = vmatpush1.msra.mxu0 0.0
    %179 = vmatprep.subr.mxu0 0.0
    %180 = vmatpush1.msra.mxu0 0.0
    %181 = vmatprep.subr.mxu0 0.0
    %182 = vmatpush1.msra.mxu0 0.0
    %183 = vmatprep.subr.mxu0 0.0
    %184 = vmatpush1.msra.mxu0 0.0
    %185 = vmatprep.subr.mxu0 0.0
    %186 = vmatpush1.msra.mxu0 0.0
    %187 = vmatprep.subr.mxu0 0.0
    %188 = vmatpush1.msra.mxu0 %v69
    %189 = vmatprep.subr.mxu0 0.0
    %190 = vmatpush1.msra.mxu0 %v68
    %191 = vmatprep.subr.mxu0 0.0
    %192 = vmatpush1.msra.mxu0 %v67
    %193 = vmatprep.subr.mxu0 0.0
    %194 = vmatpush1.msra.mxu0 %v66
    %195 = vmatprep.subr.mxu0 0.0
    %196 = vmatpush2.msra.mxu0 0.0
    %197 = vmatprep.subr.mxu0 0.0
    %198 = vmatpush2.msra.mxu0 0.0
    %199 = vmatprep.subr.mxu0 0.0
    %200 = vmatpush2.msra.mxu0 0.0
    %201 = vmatprep.subr.mxu0 0.0
    %202 = vmatpush2.msra.mxu0 0.0
    %203 = vmatprep.subr.mxu0 0.0
    %204 = vmatpush2.msra.mxu0 0.0
    %205 = vmatprep.subr.mxu0 0.0
    %206 = vmatpush2.msra.mxu0 0.0
    %207 = vmatprep.subr.mxu0 0.0
    %208 = vmatpush2.msra.mxu0 0.0
    %209 = vmatprep.subr.mxu0 0.0
    %210 = vmatpush2.msra.mxu0 0.0
    %211 = vmatprep.subr.mxu0 0.0
    %212 = vmatpush2.msra.mxu0 0.0
    %213 = vmatprep.subr.mxu0 0.0
    %214 = vmatpush2.msra.mxu0 0.0
    %215 = vmatprep.subr.mxu0 0.0
    %216 = vmatpush2.msra.mxu0 0.0
    %217 = vmatprep.subr.mxu0 0.0
    %218 = vmatpush2.msra.mxu0 0.0
    %219 = vmatprep.subr.mxu0 0.0
    %220 = vmatpush2.msra.mxu0 0.0
    %221 = vmatprep.subr.mxu0 0.0
    %222 = vmatpush2.msra.mxu0 0.0
    %223 = vmatprep.subr.mxu0 0.0
    %224 = vmatpush2.msra.mxu0 0.0
    %225 = vmatprep.subr.mxu0 0.0
    %226 = vmatpush2.msra.mxu0 0.0
    %227 = vmatprep.mubr.f32.mxu0 0.0
    %228 = vmatmul.mubr.f32.gmra.mxu0 %v161
    %v229 = vpop.f32.mrf.mxu0
    %v230 = vadd.f32 0.0, %v229
    %v231 = vpop.f32.mrf.mxu0
    %232 = vdwg.mxu0
    %v233 = vadd.f32 %v151, %v230
    %v234 = vxor.u32 %v233, 2147483648
    %v235 = vmul.f32 %v234, 1.442695
    %v236 = vpow.pop %v235
    %v237 = vadd.f32 %v236, 1.0
    %v238 = vrcp.pop %v237
    %v239 = vmul.f32 1.0, %v238
    %v240 = vtanh.pop %v233
    %v241 = vmul.f32 %v239, 0.0
    %243 = vrot.lane.b32.xlu0 %v240, 64
    %v244 = vpop.permute.xlu0 %243
    %v246 = vmul.f32 %v239, %v244
    %248 = vrot.lane.b32.xlu0 %v246, 32
    %v249 = vpop.permute.xlu0 %248
    %v251 = vadd.f32 %v241, %v249
    %v252 = vtanh.pop %v251
    %254 = vrot.lane.b32.xlu0 %v252, 64
    %v255 = vpop.permute.xlu0 %254
    %v257 = vmul.f32 %v239, %v255
    %259 = vrot.lane.b32.xlu0 %v257, 32
    %v260 = vpop.permute.xlu0 %259
    %v261 = vsel %vm159, %v260, 0
    %263 = vmatprep.subr.mxu0 0.0
    %264 = vmatpush1.msra.mxu0 0.0
    %265 = vmatprep.subr.mxu0 0.0
    %266 = vmatpush1.msra.mxu0 0.0
    %267 = vmatprep.subr.mxu0 0.0
    %268 = vmatpush1.msra.mxu0 0.0
    %269 = vmatprep.subr.mxu0 0.0
    %270 = vmatpush1.msra.mxu0 0.0
    %271 = vmatprep.subr.mxu0 0.0
    %272 = vmatpush1.msra.mxu0 0.0
    %273 = vmatprep.subr.mxu0 0.0
    %274 = vmatpush1.msra.mxu0 0.0
    %275 = vmatprep.subr.mxu0 0.0
    %276 = vmatpush1.msra.mxu0 0.0
    %277 = vmatprep.subr.mxu0 0.0
    %278 = vmatpush1.msra.mxu0 0.0
    %279 = vmatprep.subr.mxu0 0.0
    %280 = vmatpush1.msra.mxu0 0.0
    %281 = vmatprep.subr.mxu0 0.0
    %282 = vmatpush1.msra.mxu0 0.0
    %283 = vmatprep.subr.mxu0 0.0
    %284 = vmatpush1.msra.mxu0 0.0
    %285 = vmatprep.subr.mxu0 0.0
    %286 = vmatpush1.msra.mxu0 0.0
    %287 = vmatprep.subr.mxu0 0.0
    %288 = vmatpush1.msra.mxu0 %v69
    %289 = vmatprep.subr.mxu0 0.0
    %290 = vmatpush1.msra.mxu0 %v68
    %291 = vmatprep.subr.mxu0 0.0
    %292 = vmatpush1.msra.mxu0 %v67
    %293 = vmatprep.subr.mxu0 0.0
    %294 = vmatpush1.msra.mxu0 %v66
    %295 = vmatprep.subr.mxu0 0.0
    %296 = vmatpush2.msra.mxu0 0.0
    %297 = vmatprep.subr.mxu0 0.0
    %298 = vmatpush2.msra.mxu0 0.0
    %299 = vmatprep.subr.mxu0 0.0
    %300 = vmatpush2.msra.mxu0 0.0
    %301 = vmatprep.subr.mxu0 0.0
    %302 = vmatpush2.msra.mxu0 0.0
    %303 = vmatprep.subr.mxu0 0.0
    %304 = vmatpush2.msra.mxu0 0.0
    %305 = vmatprep.subr.mxu0 0.0
    %306 = vmatpush2.msra.mxu0 0.0
    %307 = vmatprep.subr.mxu0 0.0
    %308 = vmatpush2.msra.mxu0 0.0
    %309 = vmatprep.subr.mxu0 0.0
    %310 = vmatpush2.msra.mxu0 0.0
    %311 = vmatprep.subr.mxu0 0.0
    %312 = vmatpush2.msra.mxu0 0.0
    %313 = vmatprep.subr.mxu0 0.0
    %314 = vmatpush2.msra.mxu0 0.0
    %315 = vmatprep.subr.mxu0 0.0
    %316 = vmatpush2.msra.mxu0 0.0
    %317 = vmatprep.subr.mxu0 0.0
    %318 = vmatpush2.msra.mxu0 0.0
    %319 = vmatprep.subr.mxu0 0.0
    %320 = vmatpush2.msra.mxu0 0.0
    %321 = vmatprep.subr.mxu0 0.0
    %322 = vmatpush2.msra.mxu0 0.0
    %323 = vmatprep.subr.mxu0 0.0
    %324 = vmatpush2.msra.mxu0 0.0
    %325 = vmatprep.subr.mxu0 0.0
    %326 = vmatpush2.msra.mxu0 0.0
    %327 = vmatprep.mubr.f32.mxu0 0.0
    %328 = vmatmul.mubr.f32.gmra.mxu0 %v261
    %v329 = vpop.f32.mrf.mxu0
    %v330 = vadd.f32 0.0, %v329
    %v331 = vpop.f32.mrf.mxu0
    %332 = vdwg.mxu0
    %v334 = vrot.slane %v330, 6
    %v336 = vadd.f32 %v151, %v334
    %v337 = vxor.u32 %v336, 2147483648
    %v338 = vmul.f32 %v337, 1.442695
    %v339 = vpow.pop %v338
    %v340 = vadd.f32 %v339, 1.0
    %v341 = vrcp.pop %v340
    %v342 = vmul.f32 1.0, %v341
    %v343 = vtanh.pop %v336
    %v345 = vrot.slane %v251, 6
    %v347 = vmul.f32 %v342, %v345
    %349 = vrot.lane.b32.xlu0 %v343, 64
    %v350 = vpop.permute.xlu0 %349
    %v352 = vmul.f32 %v342, %v350
    %354 = vrot.lane.b32.xlu0 %v352, 32
    %v355 = vpop.permute.xlu0 %354
    %v357 = vadd.f32 %v347, %v355
    %v358 = vtanh.pop %v357
    %360 = vrot.lane.b32.xlu0 %v358, 64
    %v361 = vpop.permute.xlu0 %360
    %v363 = vmul.f32 %v342, %v361
    %v365 = vrot.slane %v363, 2
    %366 = vrot.lane.b32.xlu0 %v365, 32
    %v367 = vpop.permute.xlu0 %366
    %v368 = vsel %vm159, %v367, 0
    %370 = vmatprep.subr.mxu0 0.0
    %371 = vmatpush1.msra.mxu0 0.0
    %372 = vmatprep.subr.mxu0 0.0
    %373 = vmatpush1.msra.mxu0 0.0
    %374 = vmatprep.subr.mxu0 0.0
    %375 = vmatpush1.msra.mxu0 0.0
    %376 = vmatprep.subr.mxu0 0.0
    %377 = vmatpush1.msra.mxu0 0.0
    %378 = vmatprep.subr.mxu0 0.0
    %379 = vmatpush1.msra.mxu0 0.0
    %380 = vmatprep.subr.mxu0 0.0
    %381 = vmatpush1.msra.mxu0 0.0
    %382 = vmatprep.subr.mxu0 0.0
    %383 = vmatpush1.msra.mxu0 0.0
    %384 = vmatprep.subr.mxu0 0.0
    %385 = vmatpush1.msra.mxu0 0.0
    %386 = vmatprep.subr.mxu0 0.0
    %387 = vmatpush1.msra.mxu0 0.0
    %388 = vmatprep.subr.mxu0 0.0
    %389 = vmatpush1.msra.mxu0 0.0
    %390 = vmatprep.subr.mxu0 0.0
    %391 = vmatpush1.msra.mxu0 0.0
    %392 = vmatprep.subr.mxu0 0.0
    %393 = vmatpush1.msra.mxu0 0.0
    %394 = vmatprep.subr.mxu0 0.0
    %395 = vmatpush1.msra.mxu0 %v69
    %396 = vmatprep.subr.mxu0 0.0
    %397 = vmatpush1.msra.mxu0 %v68
    %398 = vmatprep.subr.mxu0 0.0
    %399 = vmatpush1.msra.mxu0 %v67
    %400 = vmatprep.subr.mxu0 0.0
    %401 = vmatpush1.msra.mxu0 %v66
    %402 = vmatprep.subr.mxu0 0.0
    %403 = vmatpush2.msra.mxu0 0.0
    %404 = vmatprep.subr.mxu0 0.0
    %405 = vmatpush2.msra.mxu0 0.0
    %406 = vmatprep.subr.mxu0 0.0
    %407 = vmatpush2.msra.mxu0 0.0
    %408 = vmatprep.subr.mxu0 0.0
    %409 = vmatpush2.msra.mxu0 0.0
    %410 = vmatprep.subr.mxu0 0.0
    %411 = vmatpush2.msra.mxu0 0.0
    %412 = vmatprep.subr.mxu0 0.0
    %413 = vmatpush2.msra.mxu0 0.0
    %414 = vmatprep.subr.mxu0 0.0
    %415 = vmatpush2.msra.mxu0 0.0
    %416 = vmatprep.subr.mxu0 0.0
    %417 = vmatpush2.msra.mxu0 0.0
    %418 = vmatprep.subr.mxu0 0.0
    %419 = vmatpush2.msra.mxu0 0.0
    %420 = vmatprep.subr.mxu0 0.0
    %421 = vmatpush2.msra.mxu0 0.0
    %422 = vmatprep.subr.mxu0 0.0
    %423 = vmatpush2.msra.mxu0 0.0
    %424 = vmatprep.subr.mxu0 0.0
    %425 = vmatpush2.msra.mxu0 0.0
    %426 = vmatprep.subr.mxu0 0.0
    %427 = vmatpush2.msra.mxu0 0.0
    %428 = vmatprep.subr.mxu0 0.0
    %429 = vmatpush2.msra.mxu0 0.0
    %430 = vmatprep.subr.mxu0 0.0
    %431 = vmatpush2.msra.mxu0 0.0
    %432 = vmatprep.subr.mxu0 0.0
    %433 = vmatpush2.msra.mxu0 0.0
    %434 = vmatprep.mubr.f32.mxu0 0.0
    %435 = vmatmul.mubr.f32.gmra.mxu0 %v368
    %v436 = vpop.f32.mrf.mxu0
    %v437 = vadd.f32 0.0, %v436
    %v438 = vpop.f32.mrf.mxu0
    %439 = vdwg.mxu0
    %v441 = vrot.slane %v437, 4
    %v443 = vadd.f32 %v151, %v441
    %v444 = vxor.u32 %v443, 2147483648
    %v445 = vmul.f32 %v444, 1.442695
    %v446 = vpow.pop %v445
    %v447 = vadd.f32 %v446, 1.0
    %v448 = vrcp.pop %v447
    %v449 = vmul.f32 1.0, %v448
    %v450 = vtanh.pop %v443
    %v452 = vrot.slane %v357, 6
    %v454 = vmul.f32 %v449, %v452
    %456 = vrot.lane.b32.xlu0 %v450, 64
    %v457 = vpop.permute.xlu0 %456
    %v459 = vmul.f32 %v449, %v457
    %461 = vrot.lane.b32.xlu0 %v459, 32
    %v462 = vpop.permute.xlu0 %461
    %v464 = vadd.f32 %v454, %v462
    %v465 = vtanh.pop %v464
    %467 = vrot.lane.b32.xlu0 %v465, 64
    %v468 = vpop.permute.xlu0 %467
    %v470 = vmul.f32 %v449, %v468
    %v472 = vrot.slane %v470, 4
    %473 = vrot.lane.b32.xlu0 %v472, 32
    %v474 = vpop.permute.xlu0 %473
    %v475 = vsel %vm159, %v474, 0
    %477 = vmatprep.subr.mxu0 0.0
    %478 = vmatpush1.msra.mxu0 0.0
    %479 = vmatprep.subr.mxu0 0.0
    %480 = vmatpush1.msra.mxu0 0.0
    %481 = vmatprep.subr.mxu0 0.0
    %482 = vmatpush1.msra.mxu0 0.0
    %483 = vmatprep.subr.mxu0 0.0
    %484 = vmatpush1.msra.mxu0 0.0
    %485 = vmatprep.subr.mxu0 0.0
    %486 = vmatpush1.msra.mxu0 0.0
    %487 = vmatprep.subr.mxu0 0.0
    %488 = vmatpush1.msra.mxu0 0.0
    %489 = vmatprep.subr.mxu0 0.0
    %490 = vmatpush1.msra.mxu0 0.0
    %491 = vmatprep.subr.mxu0 0.0
    %492 = vmatpush1.msra.mxu0 0.0
    %493 = vmatprep.subr.mxu0 0.0
    %494 = vmatpush1.msra.mxu0 0.0
    %495 = vmatprep.subr.mxu0 0.0
    %496 = vmatpush1.msra.mxu0 0.0
    %497 = vmatprep.subr.mxu0 0.0
    %498 = vmatpush1.msra.mxu0 0.0
    %499 = vmatprep.subr.mxu0 0.0
    %500 = vmatpush1.msra.mxu0 0.0
    %501 = vmatprep.subr.mxu0 0.0
    %502 = vmatpush1.msra.mxu0 %v69
    %503 = vmatprep.subr.mxu0 0.0
    %504 = vmatpush1.msra.mxu0 %v68
    %505 = vmatprep.subr.mxu0 0.0
    %506 = vmatpush1.msra.mxu0 %v67
    %507 = vmatprep.subr.mxu0 0.0
    %508 = vmatpush1.msra.mxu0 %v66
    %509 = vmatprep.subr.mxu0 0.0
    %510 = vmatpush2.msra.mxu0 0.0
    %511 = vmatprep.subr.mxu0 0.0
    %512 = vmatpush2.msra.mxu0 0.0
    %513 = vmatprep.subr.mxu0 0.0
    %514 = vmatpush2.msra.mxu0 0.0
    %515 = vmatprep.subr.mxu0 0.0
    %516 = vmatpush2.msra.mxu0 0.0
    %517 = vmatprep.subr.mxu0 0.0
    %518 = vmatpush2.msra.mxu0 0.0
    %519 = vmatprep.subr.mxu0 0.0
    %520 = vmatpush2.msra.mxu0 0.0
    %521 = vmatprep.subr.mxu0 0.0
    %522 = vmatpush2.msra.mxu0 0.0
    %523 = vmatprep.subr.mxu0 0.0
    %524 = vmatpush2.msra.mxu0 0.0
    %525 = vmatprep.subr.mxu0 0.0
    %526 = vmatpush2.msra.mxu0 0.0
    %527 = vmatprep.subr.mxu0 0.0
    %528 = vmatpush2.msra.mxu0 0.0
    %529 = vmatprep.subr.mxu0 0.0
    %530 = vmatpush2.msra.mxu0 0.0
    %531 = vmatprep.subr.mxu0 0.0
    %532 = vmatpush2.msra.mxu0 0.0
    %533 = vmatprep.subr.mxu0 0.0
    %534 = vmatpush2.msra.mxu0 0.0
    %535 = vmatprep.subr.mxu0 0.0
    %536 = vmatpush2.msra.mxu0 0.0
    %537 = vmatprep.subr.mxu0 0.0
    %538 = vmatpush2.msra.mxu0 0.0
    %539 = vmatprep.subr.mxu0 0.0
    %540 = vmatpush2.msra.mxu0 0.0
    %541 = vmatprep.mubr.f32.mxu0 0.0
    %542 = vmatmul.mubr.f32.gmra.mxu0 %v475
    %v543 = vpop.f32.mrf.mxu0
    %v544 = vadd.f32 0.0, %v543
    %v545 = vpop.f32.mrf.mxu0
    %546 = vdwg.mxu0
    %v548 = vrot.slane %v544, 2
    %v550 = vadd.f32 %v151, %v548
    %v551 = vxor.u32 %v550, 2147483648
    %v552 = vmul.f32 %v551, 1.442695
    %v553 = vpow.pop %v552
    %v554 = vadd.f32 %v553, 1.0
    %v555 = vrcp.pop %v554
    %v556 = vmul.f32 1.0, %v555
    %v557 = vtanh.pop %v550
    %v559 = vrot.slane %v464, 6
    %v561 = vmul.f32 %v556, %v559
    %563 = vrot.lane.b32.xlu0 %v557, 64
    %v564 = vpop.permute.xlu0 %563
    %v566 = vmul.f32 %v556, %v564
    %568 = vrot.lane.b32.xlu0 %v566, 32
    %v569 = vpop.permute.xlu0 %568
    %v571 = vadd.f32 %v561, %v569
    %v572 = vtanh.pop %v571
    %574 = vrot.lane.b32.xlu0 %v572, 64
    %v575 = vpop.permute.xlu0 %574
    %v577 = vmul.f32 %v556, %v575
    %v579 = vrot.slane %v577, 6
    %580 = vrot.lane.b32.xlu0 %v579, 32
    %v581 = vpop.permute.xlu0 %580
    %v582 = vsel %vm159, %v581, 0
    %584 = vmatprep.subr.mxu0 0.0
    %585 = vmatpush1.msra.mxu0 0.0
    %586 = vmatprep.subr.mxu0 0.0
    %587 = vmatpush1.msra.mxu0 0.0
    %588 = vmatprep.subr.mxu0 0.0
    %589 = vmatpush1.msra.mxu0 0.0
    %590 = vmatprep.subr.mxu0 0.0
    %591 = vmatpush1.msra.mxu0 0.0
    %592 = vmatprep.subr.mxu0 0.0
    %593 = vmatpush1.msra.mxu0 0.0
    %594 = vmatprep.subr.mxu0 0.0
    %595 = vmatpush1.msra.mxu0 0.0
    %596 = vmatprep.subr.mxu0 0.0
    %597 = vmatpush1.msra.mxu0 0.0
    %598 = vmatprep.subr.mxu0 0.0
    %599 = vmatpush1.msra.mxu0 0.0
    %600 = vmatprep.subr.mxu0 0.0
    %601 = vmatpush1.msra.mxu0 0.0
    %602 = vmatprep.subr.mxu0 0.0
    %603 = vmatpush1.msra.mxu0 0.0
    %604 = vmatprep.subr.mxu0 0.0
    %605 = vmatpush1.msra.mxu0 0.0
    %606 = vmatprep.subr.mxu0 0.0
    %607 = vmatpush1.msra.mxu0 0.0
    %608 = vmatprep.subr.mxu0 0.0
    %609 = vmatpush1.msra.mxu0 %v69
    %610 = vmatprep.subr.mxu0 0.0
    %611 = vmatpush1.msra.mxu0 %v68
    %612 = vmatprep.subr.mxu0 0.0
    %613 = vmatpush1.msra.mxu0 %v67
    %614 = vmatprep.subr.mxu0 0.0
    %615 = vmatpush1.msra.mxu0 %v66
    %616 = vmatprep.subr.mxu0 0.0
    %617 = vmatpush2.msra.mxu0 0.0
    %618 = vmatprep.subr.mxu0 0.0
    %619 = vmatpush2.msra.mxu0 0.0
    %620 = vmatprep.subr.mxu0 0.0
    %621 = vmatpush2.msra.mxu0 0.0
    %622 = vmatprep.subr.mxu0 0.0
    %623 = vmatpush2.msra.mxu0 0.0
    %624 = vmatprep.subr.mxu0 0.0
    %625 = vmatpush2.msra.mxu0 0.0
    %626 = vmatprep.subr.mxu0 0.0
    %627 = vmatpush2.msra.mxu0 0.0
    %628 = vmatprep.subr.mxu0 0.0
    %629 = vmatpush2.msra.mxu0 0.0
    %630 = vmatprep.subr.mxu0 0.0
    %631 = vmatpush2.msra.mxu0 0.0
    %632 = vmatprep.subr.mxu0 0.0
    %633 = vmatpush2.msra.mxu0 0.0
    %634 = vmatprep.subr.mxu0 0.0
    %635 = vmatpush2.msra.mxu0 0.0
    %636 = vmatprep.subr.mxu0 0.0
    %637 = vmatpush2.msra.mxu0 0.0
    %638 = vmatprep.subr.mxu0 0.0
    %639 = vmatpush2.msra.mxu0 0.0
    %640 = vmatprep.subr.mxu0 0.0
    %641 = vmatpush2.msra.mxu0 0.0
    %642 = vmatprep.subr.mxu0 0.0
    %643 = vmatpush2.msra.mxu0 0.0
    %644 = vmatprep.subr.mxu0 0.0
    %645 = vmatpush2.msra.mxu0 0.0
    %646 = vmatprep.subr.mxu0 0.0
    %647 = vmatpush2.msra.mxu0 0.0
    %648 = vmatprep.mubr.f32.mxu0 0.0
    %649 = vmatmul.mubr.f32.gmra.mxu0 %v582
    %v650 = vpop.f32.mrf.mxu0
    %v651 = vadd.f32 0.0, %v650
    %v652 = vpop.f32.mrf.mxu0
    %653 = vdwg.mxu0
    %v654 = vadd.f32 %v156, %v651
    %v655 = vxor.u32 %v654, 2147483648
    %v656 = vmul.f32 %v655, 1.442695
    %v657 = vpow.pop %v656
    %v658 = vadd.f32 %v657, 1.0
    %v659 = vrcp.pop %v658
    %v660 = vmul.f32 1.0, %v659
    %v661 = vtanh.pop %v654
    %v663 = vrot.slane %v571, 6
    %v665 = vmul.f32 %v660, %v663
    %667 = vrot.lane.b32.xlu0 %v661, 64
    %v668 = vpop.permute.xlu0 %667
    %v670 = vmul.f32 %v660, %v668
    %672 = vrot.lane.b32.xlu0 %v670, 32
    %v673 = vpop.permute.xlu0 %672
    %v675 = vadd.f32 %v665, %v673
    %v676 = vtanh.pop %v675
    %678 = vrot.lane.b32.xlu0 %v676, 64
    %v679 = vpop.permute.xlu0 %678
    %v681 = vmul.f32 %v660, %v679
    %683 = vrot.lane.b32.xlu0 %v681, 32
    %v684 = vpop.permute.xlu0 %683
    %v685 = vsel %vm159, %v684, 0
    %687 = vmatprep.subr.mxu0 0.0
    %688 = vmatpush1.msra.mxu0 0.0
    %689 = vmatprep.subr.mxu0 0.0
    %690 = vmatpush1.msra.mxu0 0.0
    %691 = vmatprep.subr.mxu0 0.0
    %692 = vmatpush1.msra.mxu0 0.0
    %693 = vmatprep.subr.mxu0 0.0
    %694 = vmatpush1.msra.mxu0 0.0
    %695 = vmatprep.subr.mxu0 0.0
    %696 = vmatpush1.msra.mxu0 0.0
    %697 = vmatprep.subr.mxu0 0.0
    %698 = vmatpush1.msra.mxu0 0.0
    %699 = vmatprep.subr.mxu0 0.0
    %700 = vmatpush1.msra.mxu0 0.0
    %701 = vmatprep.subr.mxu0 0.0
    %702 = vmatpush1.msra.mxu0 0.0
    %703 = vmatprep.subr.mxu0 0.0
    %704 = vmatpush1.msra.mxu0 0.0
    %705 = vmatprep.subr.mxu0 0.0
    %706 = vmatpush1.msra.mxu0 0.0
    %707 = vmatprep.subr.mxu0 0.0
    %708 = vmatpush1.msra.mxu0 0.0
    %709 = vmatprep.subr.mxu0 0.0
    %710 = vmatpush1.msra.mxu0 0.0
    %711 = vmatprep.subr.mxu0 0.0
    %712 = vmatpush1.msra.mxu0 %v69
    %713 = vmatprep.subr.mxu0 0.0
    %714 = vmatpush1.msra.mxu0 %v68
    %715 = vmatprep.subr.mxu0 0.0
    %716 = vmatpush1.msra.mxu0 %v67
    %717 = vmatprep.subr.mxu0 0.0
    %718 = vmatpush1.msra.mxu0 %v66
    %719 = vmatprep.subr.mxu0 0.0
    %720 = vmatpush2.msra.mxu0 0.0
    %721 = vmatprep.subr.mxu0 0.0
    %722 = vmatpush2.msra.mxu0 0.0
    %723 = vmatprep.subr.mxu0 0.0
    %724 = vmatpush2.msra.mxu0 0.0
    %725 = vmatprep.subr.mxu0 0.0
    %726 = vmatpush2.msra.mxu0 0.0
    %727 = vmatprep.subr.mxu0 0.0
    %728 = vmatpush2.msra.mxu0 0.0
    %729 = vmatprep.subr.mxu0 0.0
    %730 = vmatpush2.msra.mxu0 0.0
    %731 = vmatprep.subr.mxu0 0.0
    %732 = vmatpush2.msra.mxu0 0.0
    %733 = vmatprep.subr.mxu0 0.0
    %734 = vmatpush2.msra.mxu0 0.0
    %735 = vmatprep.subr.mxu0 0.0
    %736 = vmatpush2.msra.mxu0 0.0
    %737 = vmatprep.subr.mxu0 0.0
    %738 = vmatpush2.msra.mxu0 0.0
    %739 = vmatprep.subr.mxu0 0.0
    %740 = vmatpush2.msra.mxu0 0.0
    %741 = vmatprep.subr.mxu0 0.0
    %742 = vmatpush2.msra.mxu0 0.0
    %743 = vmatprep.subr.mxu0 0.0
    %744 = vmatpush2.msra.mxu0 0.0
    %745 = vmatprep.subr.mxu0 0.0
    %746 = vmatpush2.msra.mxu0 0.0
    %747 = vmatprep.subr.mxu0 0.0
    %748 = vmatpush2.msra.mxu0 0.0
    %749 = vmatprep.subr.mxu0 0.0
    %750 = vmatpush2.msra.mxu0 0.0
    %751 = vmatprep.mubr.f32.mxu0 0.0
    %752 = vmatmul.mubr.f32.gmra.mxu0 %v685
    %v753 = vpop.f32.mrf.mxu0
    %v754 = vadd.f32 0.0, %v753
    %v755 = vpop.f32.mrf.mxu0
    %756 = vdwg.mxu0
    %v758 = vrot.slane %v754, 6
    %v760 = vadd.f32 %v156, %v758
    %v761 = vxor.u32 %v760, 2147483648
    %v762 = vmul.f32 %v761, 1.442695
    %v763 = vpow.pop %v762
    %v764 = vadd.f32 %v763, 1.0
    %v765 = vrcp.pop %v764
    %v766 = vmul.f32 1.0, %v765
    %v767 = vtanh.pop %v760
    %v769 = vrot.slane %v675, 6
    %v771 = vmul.f32 %v766, %v769
    %773 = vrot.lane.b32.xlu0 %v767, 64
    %v774 = vpop.permute.xlu0 %773
    %v776 = vmul.f32 %v766, %v774
    %778 = vrot.lane.b32.xlu0 %v776, 32
    %v779 = vpop.permute.xlu0 %778
    %v781 = vadd.f32 %v771, %v779
    %v782 = vtanh.pop %v781
    %784 = vrot.lane.b32.xlu0 %v782, 64
    %v785 = vpop.permute.xlu0 %784
    %v787 = vmul.f32 %v766, %v785
    %v789 = vrot.slane %v787, 2
    %790 = vrot.lane.b32.xlu0 %v789, 32
    %v791 = vpop.permute.xlu0 %790
    %v792 = vsel %vm159, %v791, 0
    %794 = vmatprep.subr.mxu0 0.0
    %795 = vmatpush1.msra.mxu0 0.0
    %796 = vmatprep.subr.mxu0 0.0
    %797 = vmatpush1.msra.mxu0 0.0
    %798 = vmatprep.subr.mxu0 0.0
    %799 = vmatpush1.msra.mxu0 0.0
    %800 = vmatprep.subr.mxu0 0.0
    %801 = vmatpush1.msra.mxu0 0.0
    %802 = vmatprep.subr.mxu0 0.0
    %803 = vmatpush1.msra.mxu0 0.0
    %804 = vmatprep.subr.mxu0 0.0
    %805 = vmatpush1.msra.mxu0 0.0
    %806 = vmatprep.subr.mxu0 0.0
    %807 = vmatpush1.msra.mxu0 0.0
    %808 = vmatprep.subr.mxu0 0.0
    %809 = vmatpush1.msra.mxu0 0.0
    %810 = vmatprep.subr.mxu0 0.0
    %811 = vmatpush1.msra.mxu0 0.0
    %812 = vmatprep.subr.mxu0 0.0
    %813 = vmatpush1.msra.mxu0 0.0
    %814 = vmatprep.subr.mxu0 0.0
    %815 = vmatpush1.msra.mxu0 0.0
    %816 = vmatprep.subr.mxu0 0.0
    %817 = vmatpush1.msra.mxu0 0.0
    %818 = vmatprep.subr.mxu0 0.0
    %819 = vmatpush1.msra.mxu0 %v69
    %820 = vmatprep.subr.mxu0 0.0
    %821 = vmatpush1.msra.mxu0 %v68
    %822 = vmatprep.subr.mxu0 0.0
    %823 = vmatpush1.msra.mxu0 %v67
    %824 = vmatprep.subr.mxu0 0.0
    %825 = vmatpush1.msra.mxu0 %v66
    %826 = vmatprep.subr.mxu0 0.0
    %827 = vmatpush2.msra.mxu0 0.0
    %828 = vmatprep.subr.mxu0 0.0
    %829 = vmatpush2.msra.mxu0 0.0
    %830 = vmatprep.subr.mxu0 0.0
    %831 = vmatpush2.msra.mxu0 0.0
    %832 = vmatprep.subr.mxu0 0.0
    %833 = vmatpush2.msra.mxu0 0.0
    %834 = vmatprep.subr.mxu0 0.0
    %835 = vmatpush2.msra.mxu0 0.0
    %836 = vmatprep.subr.mxu0 0.0
    %837 = vmatpush2.msra.mxu0 0.0
    %838 = vmatprep.subr.mxu0 0.0
    %839 = vmatpush2.msra.mxu0 0.0
    %840 = vmatprep.subr.mxu0 0.0
    %841 = vmatpush2.msra.mxu0 0.0
    %842 = vmatprep.subr.mxu0 0.0
    %843 = vmatpush2.msra.mxu0 0.0
    %844 = vmatprep.subr.mxu0 0.0
    %845 = vmatpush2.msra.mxu0 0.0
    %846 = vmatprep.subr.mxu0 0.0
    %847 = vmatpush2.msra.mxu0 0.0
    %848 = vmatprep.subr.mxu0 0.0
    %849 = vmatpush2.msra.mxu0 0.0
    %850 = vmatprep.subr.mxu0 0.0
    %851 = vmatpush2.msra.mxu0 0.0
    %852 = vmatprep.subr.mxu0 0.0
    %853 = vmatpush2.msra.mxu0 0.0
    %854 = vmatprep.subr.mxu0 0.0
    %855 = vmatpush2.msra.mxu0 0.0
    %856 = vmatprep.subr.mxu0 0.0
    %857 = vmatpush2.msra.mxu0 0.0
    %858 = vmatprep.mubr.f32.mxu0 0.0
    %859 = vmatmul.mubr.f32.gmra.mxu0 %v792
    %v860 = vpop.f32.mrf.mxu0
    %v861 = vadd.f32 0.0, %v860
    %v862 = vpop.f32.mrf.mxu0
    %863 = vdwg.mxu0
    %v865 = vrot.slane %v861, 4
    %v867 = vadd.f32 %v156, %v865
    %v868 = vxor.u32 %v867, 2147483648
    %v869 = vmul.f32 %v868, 1.442695
    %v870 = vpow.pop %v869
    %v871 = vadd.f32 %v870, 1.0
    %v872 = vrcp.pop %v871
    %v873 = vmul.f32 1.0, %v872
    %v874 = vtanh.pop %v867
    %v876 = vrot.slane %v781, 6
    %v878 = vmul.f32 %v873, %v876
    %880 = vrot.lane.b32.xlu0 %v874, 64
    %v881 = vpop.permute.xlu0 %880
    %v883 = vmul.f32 %v873, %v881
    %885 = vrot.lane.b32.xlu0 %v883, 32
    %v886 = vpop.permute.xlu0 %885
    %v888 = vadd.f32 %v878, %v886
    %v889 = vtanh.pop %v888
    %891 = vrot.lane.b32.xlu0 %v889, 64
    %v892 = vpop.permute.xlu0 %891
    %v894 = vmul.f32 %v873, %v892
    %v896 = vrot.slane %v894, 4
    %897 = vrot.lane.b32.xlu0 %v896, 32
    %v898 = vpop.permute.xlu0 %897
    %v899 = vsel %vm159, %v898, 0
    %901 = vmatprep.subr.mxu0 0.0
    %902 = vmatpush1.msra.mxu0 0.0
    %903 = vmatprep.subr.mxu0 0.0
    %904 = vmatpush1.msra.mxu0 0.0
    %905 = vmatprep.subr.mxu0 0.0
    %906 = vmatpush1.msra.mxu0 0.0
    %907 = vmatprep.subr.mxu0 0.0
    %908 = vmatpush1.msra.mxu0 0.0
    %909 = vmatprep.subr.mxu0 0.0
    %910 = vmatpush1.msra.mxu0 0.0
    %911 = vmatprep.subr.mxu0 0.0
    %912 = vmatpush1.msra.mxu0 0.0
    %913 = vmatprep.subr.mxu0 0.0
    %914 = vmatpush1.msra.mxu0 0.0
    %915 = vmatprep.subr.mxu0 0.0
    %916 = vmatpush1.msra.mxu0 0.0
    %917 = vmatprep.subr.mxu0 0.0
    %918 = vmatpush1.msra.mxu0 0.0
    %919 = vmatprep.subr.mxu0 0.0
    %920 = vmatpush1.msra.mxu0 0.0
    %921 = vmatprep.subr.mxu0 0.0
    %922 = vmatpush1.msra.mxu0 0.0
    %923 = vmatprep.subr.mxu0 0.0
    %924 = vmatpush1.msra.mxu0 0.0
    %925 = vmatprep.subr.mxu0 0.0
    %926 = vmatpush1.msra.mxu0 %v69
    %927 = vmatprep.subr.mxu0 0.0
    %928 = vmatpush1.msra.mxu0 %v68
    %929 = vmatprep.subr.mxu0 0.0
    %930 = vmatpush1.msra.mxu0 %v67
    %931 = vmatprep.subr.mxu0 0.0
    %932 = vmatpush1.msra.mxu0 %v66
    %933 = vmatprep.subr.mxu0 0.0
    %934 = vmatpush2.msra.mxu0 0.0
    %935 = vmatprep.subr.mxu0 0.0
    %936 = vmatpush2.msra.mxu0 0.0
    %937 = vmatprep.subr.mxu0 0.0
    %938 = vmatpush2.msra.mxu0 0.0
    %939 = vmatprep.subr.mxu0 0.0
    %940 = vmatpush2.msra.mxu0 0.0
    %941 = vmatprep.subr.mxu0 0.0
    %942 = vmatpush2.msra.mxu0 0.0
    %943 = vmatprep.subr.mxu0 0.0
    %944 = vmatpush2.msra.mxu0 0.0
    %945 = vmatprep.subr.mxu0 0.0
    %946 = vmatpush2.msra.mxu0 0.0
    %947 = vmatprep.subr.mxu0 0.0
    %948 = vmatpush2.msra.mxu0 0.0
    %949 = vmatprep.subr.mxu0 0.0
    %950 = vmatpush2.msra.mxu0 0.0
    %951 = vmatprep.subr.mxu0 0.0
    %952 = vmatpush2.msra.mxu0 0.0
    %953 = vmatprep.subr.mxu0 0.0
    %954 = vmatpush2.msra.mxu0 0.0
    %955 = vmatprep.subr.mxu0 0.0
    %956 = vmatpush2.msra.mxu0 0.0
    %957 = vmatprep.subr.mxu0 0.0
    %958 = vmatpush2.msra.mxu0 0.0
    %959 = vmatprep.subr.mxu0 0.0
    %960 = vmatpush2.msra.mxu0 0.0
    %961 = vmatprep.subr.mxu0 0.0
    %962 = vmatpush2.msra.mxu0 0.0
    %963 = vmatprep.subr.mxu0 0.0
    %964 = vmatpush2.msra.mxu0 0.0
    %965 = vmatprep.mubr.f32.mxu0 0.0
    %966 = vmatmul.mubr.f32.gmra.mxu0 %v899
    %v967 = vpop.f32.mrf.mxu0
    %v968 = vadd.f32 0.0, %v967
    %v969 = vpop.f32.mrf.mxu0
    %970 = vdwg.mxu0
    %v972 = vrot.slane %v968, 2
    %v974 = vadd.f32 %v156, %v972
    %v975 = vxor.u32 %v974, 2147483648
    %v976 = vmul.f32 %v975, 1.442695
    %v977 = vpow.pop %v976
    %v978 = vadd.f32 %v977, 1.0
    %v979 = vrcp.pop %v978
    %v980 = vmul.f32 1.0, %v979
    %v981 = vtanh.pop %v974
    %v983 = vrot.slane %v888, 6
    %v985 = vmul.f32 %v980, %v983
    %987 = vrot.lane.b32.xlu0 %v981, 64
    %v988 = vpop.permute.xlu0 %987
    %v990 = vmul.f32 %v980, %v988
    %992 = vrot.lane.b32.xlu0 %v990, 32
    %v993 = vpop.permute.xlu0 %992
    %v995 = vadd.f32 %v985, %v993
    %v996 = vtanh.pop %v995
    %998 = vrot.lane.b32.xlu0 %v996, 64
    %v999 = vpop.permute.xlu0 %998
    %v1001 = vmul.f32 %v980, %v999
    %vm1002 = vcmask 1041408
    %v1003 = vsel %vm1002, %v257, %v363
    %vm1004 = vcmask 1043456
    %v1005 = vsel %vm1004, %v1003, %v470
    %vm1006 = vcmask 1045504
    %v1007 = vsel %vm1006, %v1005, %v577
    %v1008 = vsel %vm1002, %v681, %v787
    %v1009 = vsel %vm1004, %v1008, %v894
    %v1010 = vsel %vm1006, %v1009, %v1001
    %v1011 = vld [vmem:[%s4] sm:$0xff]
    %v1012 = vld [vmem:[%s4 + $0x8] sm:$0xff]
    %v1013 = vld [vmem:[%s4 + $0x10] sm:$0xff]
    %v1014 = vld [vmem:[%s4 + $0x18] sm:$0xff]
    %v1015 = vld [vmem:[#allocation5] sm:$0xff]
    %v1016 = vld [vmem:[#allocation5 + $0x8] sm:$0xff]
    %v1017 = vld [vmem:[#allocation5 + $0x10] sm:$0xff]
    %v1018 = vld [vmem:[#allocation5 + $0x18] sm:$0xff]
    %v1019 = vld [vmem:[%s6] sm:$0x1]
    %v1021 = vlaneseq
    %v1022 = vshrl.u32 %v1021, 7
    %v1023 = vsub.s32 0, %v1022
    %v1024 = vrot.slane %v1019, %v1023
    %1028 = vrot.lane.b32.xlu0 %v1007, 32
    %v1029 = vpop.permute.xlu0 %1028
    %1030 = vrot.lane.b32.xlu0 %v1010, 32
    %v1031 = vpop.permute.xlu0 %1030
    %v1032 = vsel %vm159, %v1029, 0
    %v1034 = vsel %vm159, %v1031, 0
    %1036 = vmatprep.subr.mxu0 0.0
    %1037 = vmatpush1.msra.mxu0 0.0
    %1038 = vmatprep.subr.mxu0 0.0
    %1039 = vmatpush1.msra.mxu0 0.0
    %1040 = vmatprep.subr.mxu0 0.0
    %1041 = vmatpush1.msra.mxu0 0.0
    %1042 = vmatprep.subr.mxu0 0.0
    %1043 = vmatpush1.msra.mxu0 0.0
    %1044 = vmatprep.subr.mxu0 0.0
    %1045 = vmatpush1.msra.mxu0 0.0
    %1046 = vmatprep.subr.mxu0 0.0
    %1047 = vmatpush1.msra.mxu0 0.0
    %1048 = vmatprep.subr.mxu0 0.0
    %1049 = vmatpush1.msra.mxu0 0.0
    %1050 = vmatprep.subr.mxu0 0.0
    %1051 = vmatpush1.msra.mxu0 0.0
    %1052 = vmatprep.subr.mxu0 0.0
    %1053 = vmatpush1.msra.mxu0 0.0
    %1054 = vmatprep.subr.mxu0 0.0
    %1055 = vmatpush1.msra.mxu0 0.0
    %1056 = vmatprep.subr.mxu0 0.0
    %1057 = vmatpush1.msra.mxu0 0.0
    %1058 = vmatprep.subr.mxu0 0.0
    %1059 = vmatpush1.msra.mxu0 0.0
    %1060 = vmatprep.subr.mxu0 0.0
    %1061 = vmatpush1.msra.mxu0 %v1014
    %1062 = vmatprep.subr.mxu0 0.0
    %1063 = vmatpush1.msra.mxu0 %v1013
    %1064 = vmatprep.subr.mxu0 0.0
    %1065 = vmatpush1.msra.mxu0 %v1012
    %1066 = vmatprep.subr.mxu0 0.0
    %1067 = vmatpush1.msra.mxu0 %v1011
    %1068 = vmatprep.subr.mxu0 0.0
    %1069 = vmatpush2.msra.mxu0 0.0
    %1070 = vmatprep.subr.mxu0 0.0
    %1071 = vmatpush2.msra.mxu0 0.0
    %1072 = vmatprep.subr.mxu0 0.0
    %1073 = vmatpush2.msra.mxu0 0.0
    %1074 = vmatprep.subr.mxu0 0.0
    %1075 = vmatpush2.msra.mxu0 0.0
    %1076 = vmatprep.subr.mxu0 0.0
    %1077 = vmatpush2.msra.mxu0 0.0
    %1078 = vmatprep.subr.mxu0 0.0
    %1079 = vmatpush2.msra.mxu0 0.0
    %1080 = vmatprep.subr.mxu0 0.0
    %1081 = vmatpush2.msra.mxu0 0.0
    %1082 = vmatprep.subr.mxu0 0.0
    %1083 = vmatpush2.msra.mxu0 0.0
    %1084 = vmatprep.subr.mxu0 0.0
    %1085 = vmatpush2.msra.mxu0 0.0
    %1086 = vmatprep.subr.mxu0 0.0
    %1087 = vmatpush2.msra.mxu0 0.0
    %1088 = vmatprep.subr.mxu0 0.0
    %1089 = vmatpush2.msra.mxu0 0.0
    %1090 = vmatprep.subr.mxu0 0.0
    %1091 = vmatpush2.msra.mxu0 0.0
    %1092 = vmatprep.subr.mxu0 0.0
    %1093 = vmatpush2.msra.mxu0 0.0
    %1094 = vmatprep.subr.mxu0 0.0
    %1095 = vmatpush2.msra.mxu0 0.0
    %1096 = vmatprep.subr.mxu0 0.0
    %1097 = vmatpush2.msra.mxu0 0.0
    %1098 = vmatprep.subr.mxu0 0.0
    %1099 = vmatpush2.msra.mxu0 0.0
    %1100 = vmatprep.mubr.f32.mxu0 0.0
    %1101 = vmatmul.mubr.f32.gmra.mxu0 %v1032
    %v1102 = vpop.f32.mrf.mxu0
    %v1103 = vadd.f32 %v1024, %v1102
    %v1104 = vpop.f32.mrf.mxu0
    %1105 = vmatprep.mubr.f32.mxu0 0.0
    %1106 = vmatmul.mubr.f32.gmra.mxu0 %v1034
    %v1107 = vpop.f32.mrf.mxu0
    %v1108 = vadd.f32 %v1024, %v1107
    %v1109 = vpop.f32.mrf.mxu0
    %1110 = vdwg.mxu0
    %1111 = vmatprep.subr.mxu0 0.0
    %1112 = vmatpush1.msra.mxu0 0.0
    %1113 = vmatprep.subr.mxu0 0.0
    %1114 = vmatpush1.msra.mxu0 0.0
    %1115 = vmatprep.subr.mxu0 0.0
    %1116 = vmatpush1.msra.mxu0 0.0
    %1117 = vmatprep.subr.mxu0 0.0
    %1118 = vmatpush1.msra.mxu0 0.0
    %1119 = vmatprep.subr.mxu0 0.0
    %1120 = vmatpush1.msra.mxu0 0.0
    %1121 = vmatprep.subr.mxu0 0.0
    %1122 = vmatpush1.msra.mxu0 0.0
    %1123 = vmatprep.subr.mxu0 0.0
    %1124 = vmatpush1.msra.mxu0 0.0
    %1125 = vmatprep.subr.mxu0 0.0
    %1126 = vmatpush1.msra.mxu0 0.0
    %1127 = vmatprep.subr.mxu0 0.0
    %1128 = vmatpush1.msra.mxu0 0.0
    %1129 = vmatprep.subr.mxu0 0.0
    %1130 = vmatpush1.msra.mxu0 0.0
    %1131 = vmatprep.subr.mxu0 0.0
    %1132 = vmatpush1.msra.mxu0 0.0
    %1133 = vmatprep.subr.mxu0 0.0
    %1134 = vmatpush1.msra.mxu0 0.0
    %1135 = vmatprep.subr.mxu0 0.0
    %1136 = vmatpush1.msra.mxu0 %v1018
    %1137 = vmatprep.subr.mxu0 0.0
    %1138 = vmatpush1.msra.mxu0 %v1017
    %1139 = vmatprep.subr.mxu0 0.0
    %1140 = vmatpush1.msra.mxu0 %v1016
    %1141 = vmatprep.subr.mxu0 0.0
    %1142 = vmatpush1.msra.mxu0 %v1015
    %1143 = vmatprep.subr.mxu0 0.0
    %1144 = vmatpush2.msra.mxu0 0.0
    %1145 = vmatprep.subr.mxu0 0.0
    %1146 = vmatpush2.msra.mxu0 0.0
    %1147 = vmatprep.subr.mxu0 0.0
    %1148 = vmatpush2.msra.mxu0 0.0
    %1149 = vmatprep.subr.mxu0 0.0
    %1150 = vmatpush2.msra.mxu0 0.0
    %1151 = vmatprep.subr.mxu0 0.0
    %1152 = vmatpush2.msra.mxu0 0.0
    %1153 = vmatprep.subr.mxu0 0.0
    %1154 = vmatpush2.msra.mxu0 0.0
    %1155 = vmatprep.subr.mxu0 0.0
    %1156 = vmatpush2.msra.mxu0 0.0
    %1157 = vmatprep.subr.mxu0 0.0
    %1158 = vmatpush2.msra.mxu0 0.0
    %1159 = vmatprep.subr.mxu0 0.0
    %1160 = vmatpush2.msra.mxu0 0.0
    %1161 = vmatprep.subr.mxu0 0.0
    %1162 = vmatpush2.msra.mxu0 0.0
    %1163 = vmatprep.subr.mxu0 0.0
    %1164 = vmatpush2.msra.mxu0 0.0
    %1165 = vmatprep.subr.mxu0 0.0
    %1166 = vmatpush2.msra.mxu0 0.0
    %1167 = vmatprep.subr.mxu0 0.0
    %1168 = vmatpush2.msra.mxu0 0.0
    %1169 = vmatprep.subr.mxu0 0.0
    %1170 = vmatpush2.msra.mxu0 0.0
    %1171 = vmatprep.subr.mxu0 0.0
    %1172 = vmatpush2.msra.mxu0 0.0
    %1173 = vmatprep.subr.mxu0 0.0
    %1174 = vmatpush2.msra.mxu0 0.0
    %1175 = vmatprep.mubr.f32.mxu0 0.0
    %1176 = vmatmul.mubr.f32.gmra.mxu0 %v161
    %v1177 = vpop.f32.mrf.mxu0
    %v1178 = vadd.f32 0.0, %v1177
    %v1179 = vpop.f32.mrf.mxu0
    %1180 = vdwg.mxu0
    %v1181 = vadd.f32 %v1103, %v1178
    %v1182 = vxor.u32 %v1181, 2147483648
    %v1183 = vmul.f32 %v1182, 1.442695
    %v1184 = vpow.pop %v1183
    %v1185 = vadd.f32 %v1184, 1.0
    %v1186 = vrcp.pop %v1185
    %v1187 = vmul.f32 1.0, %v1186
    %v1188 = vtanh.pop %v1181
    %v1189 = vmul.f32 %v1187, 0.0
    %1191 = vrot.lane.b32.xlu0 %v1188, 64
    %v1192 = vpop.permute.xlu0 %1191
    %v1194 = vmul.f32 %v1187, %v1192
    %1196 = vrot.lane.b32.xlu0 %v1194, 32
    %v1197 = vpop.permute.xlu0 %1196
    %v1199 = vadd.f32 %v1189, %v1197
    %v1200 = vtanh.pop %v1199
    %1202 = vrot.lane.b32.xlu0 %v1200, 64
    %v1203 = vpop.permute.xlu0 %1202
    %v1205 = vmul.f32 %v1187, %v1203
    %1207 = vrot.lane.b32.xlu0 %v1205, 32
    %v1208 = vpop.permute.xlu0 %1207
    %v1209 = vsel %vm159, %v1208, 0
    %1211 = vmatprep.subr.mxu0 0.0
    %1212 = vmatpush1.msra.mxu0 0.0
    %1213 = vmatprep.subr.mxu0 0.0
    %1214 = vmatpush1.msra.mxu0 0.0
    %1215 = vmatprep.subr.mxu0 0.0
    %1216 = vmatpush1.msra.mxu0 0.0
    %1217 = vmatprep.subr.mxu0 0.0
    %1218 = vmatpush1.msra.mxu0 0.0
    %1219 = vmatprep.subr.mxu0 0.0
    %1220 = vmatpush1.msra.mxu0 0.0
    %1221 = vmatprep.subr.mxu0 0.0
    %1222 = vmatpush1.msra.mxu0 0.0
    %1223 = vmatprep.subr.mxu0 0.0
    %1224 = vmatpush1.msra.mxu0 0.0
    %1225 = vmatprep.subr.mxu0 0.0
    %1226 = vmatpush1.msra.mxu0 0.0
    %1227 = vmatprep.subr.mxu0 0.0
    %1228 = vmatpush1.msra.mxu0 0.0
    %1229 = vmatprep.subr.mxu0 0.0
    %1230 = vmatpush1.msra.mxu0 0.0
    %1231 = vmatprep.subr.mxu0 0.0
    %1232 = vmatpush1.msra.mxu0 0.0
    %1233 = vmatprep.subr.mxu0 0.0
    %1234 = vmatpush1.msra.mxu0 0.0
    %1235 = vmatprep.subr.mxu0 0.0
    %1236 = vmatpush1.msra.mxu0 %v1018
    %1237 = vmatprep.subr.mxu0 0.0
    %1238 = vmatpush1.msra.mxu0 %v1017
    %1239 = vmatprep.subr.mxu0 0.0
    %1240 = vmatpush1.msra.mxu0 %v1016
    %1241 = vmatprep.subr.mxu0 0.0
    %1242 = vmatpush1.msra.mxu0 %v1015
    %1243 = vmatprep.subr.mxu0 0.0
    %1244 = vmatpush2.msra.mxu0 0.0
    %1245 = vmatprep.subr.mxu0 0.0
    %1246 = vmatpush2.msra.mxu0 0.0
    %1247 = vmatprep.subr.mxu0 0.0
    %1248 = vmatpush2.msra.mxu0 0.0
    %1249 = vmatprep.subr.mxu0 0.0
    %1250 = vmatpush2.msra.mxu0 0.0
    %1251 = vmatprep.subr.mxu0 0.0
    %1252 = vmatpush2.msra.mxu0 0.0
    %1253 = vmatprep.subr.mxu0 0.0
    %1254 = vmatpush2.msra.mxu0 0.0
    %1255 = vmatprep.subr.mxu0 0.0
    %1256 = vmatpush2.msra.mxu0 0.0
    %1257 = vmatprep.subr.mxu0 0.0
    %1258 = vmatpush2.msra.mxu0 0.0
    %1259 = vmatprep.subr.mxu0 0.0
    %1260 = vmatpush2.msra.mxu0 0.0
    %1261 = vmatprep.subr.mxu0 0.0
    %1262 = vmatpush2.msra.mxu0 0.0
    %1263 = vmatprep.subr.mxu0 0.0
    %1264 = vmatpush2.msra.mxu0 0.0
    %1265 = vmatprep.subr.mxu0 0.0
    %1266 = vmatpush2.msra.mxu0 0.0
    %1267 = vmatprep.subr.mxu0 0.0
    %1268 = vmatpush2.msra.mxu0 0.0
    %1269 = vmatprep.subr.mxu0 0.0
    %1270 = vmatpush2.msra.mxu0 0.0
    %1271 = vmatprep.subr.mxu0 0.0
    %1272 = vmatpush2.msra.mxu0 0.0
    %1273 = vmatprep.subr.mxu0 0.0
    %1274 = vmatpush2.msra.mxu0 0.0
    %1275 = vmatprep.mubr.f32.mxu0 0.0
    %1276 = vmatmul.mubr.f32.gmra.mxu0 %v1209
    %v1277 = vpop.f32.mrf.mxu0
    %v1278 = vadd.f32 0.0, %v1277
    %v1279 = vpop.f32.mrf.mxu0
    %1280 = vdwg.mxu0
    %v1282 = vrot.slane %v1278, 6
    %v1284 = vadd.f32 %v1103, %v1282
    %v1285 = vxor.u32 %v1284, 2147483648
    %v1286 = vmul.f32 %v1285, 1.442695
    %v1287 = vpow.pop %v1286
    %v1288 = vadd.f32 %v1287, 1.0
    %v1289 = vrcp.pop %v1288
    %v1290 = vmul.f32 1.0, %v1289
    %v1291 = vtanh.pop %v1284
    %v1293 = vrot.slane %v1199, 6
    %v1295 = vmul.f32 %v1290, %v1293
    %1297 = vrot.lane.b32.xlu0 %v1291, 64
    %v1298 = vpop.permute.xlu0 %1297
    %v1300 = vmul.f32 %v1290, %v1298
    %1302 = vrot.lane.b32.xlu0 %v1300, 32
    %v1303 = vpop.permute.xlu0 %1302
    %v1305 = vadd.f32 %v1295, %v1303
    %v1306 = vtanh.pop %v1305
    %1308 = vrot.lane.b32.xlu0 %v1306, 64
    %v1309 = vpop.permute.xlu0 %1308
    %v1311 = vmul.f32 %v1290, %v1309
    %v1313 = vrot.slane %v1311, 2
    %1314 = vrot.lane.b32.xlu0 %v1313, 32
    %v1315 = vpop.permute.xlu0 %1314
    %v1316 = vsel %vm159, %v1315, 0
    %1318 = vmatprep.subr.mxu0 0.0
    %1319 = vmatpush1.msra.mxu0 0.0
    %1320 = vmatprep.subr.mxu0 0.0
    %1321 = vmatpush1.msra.mxu0 0.0
    %1322 = vmatprep.subr.mxu0 0.0
    %1323 = vmatpush1.msra.mxu0 0.0
    %1324 = vmatprep.subr.mxu0 0.0
    %1325 = vmatpush1.msra.mxu0 0.0
    %1326 = vmatprep.subr.mxu0 0.0
    %1327 = vmatpush1.msra.mxu0 0.0
    %1328 = vmatprep.subr.mxu0 0.0
    %1329 = vmatpush1.msra.mxu0 0.0
    %1330 = vmatprep.subr.mxu0 0.0
    %1331 = vmatpush1.msra.mxu0 0.0
    %1332 = vmatprep.subr.mxu0 0.0
    %1333 = vmatpush1.msra.mxu0 0.0
    %1334 = vmatprep.subr.mxu0 0.0
    %1335 = vmatpush1.msra.mxu0 0.0
    %1336 = vmatprep.subr.mxu0 0.0
    %1337 = vmatpush1.msra.mxu0 0.0
    %1338 = vmatprep.subr.mxu0 0.0
    %1339 = vmatpush1.msra.mxu0 0.0
    %1340 = vmatprep.subr.mxu0 0.0
    %1341 = vmatpush1.msra.mxu0 0.0
    %1342 = vmatprep.subr.mxu0 0.0
    %1343 = vmatpush1.msra.mxu0 %v1018
    %1344 = vmatprep.subr.mxu0 0.0
    %1345 = vmatpush1.msra.mxu0 %v1017
    %1346 = vmatprep.subr.mxu0 0.0
    %1347 = vmatpush1.msra.mxu0 %v1016
    %1348 = vmatprep.subr.mxu0 0.0
    %1349 = vmatpush1.msra.mxu0 %v1015
    %1350 = vmatprep.subr.mxu0 0.0
    %1351 = vmatpush2.msra.mxu0 0.0
    %1352 = vmatprep.subr.mxu0 0.0
    %1353 = vmatpush2.msra.mxu0 0.0
    %1354 = vmatprep.subr.mxu0 0.0
    %1355 = vmatpush2.msra.mxu0 0.0
    %1356 = vmatprep.subr.mxu0 0.0
    %1357 = vmatpush2.msra.mxu0 0.0
    %1358 = vmatprep.subr.mxu0 0.0
    %1359 = vmatpush2.msra.mxu0 0.0
    %1360 = vmatprep.subr.mxu0 0.0
    %1361 = vmatpush2.msra.mxu0 0.0
    %1362 = vmatprep.subr.mxu0 0.0
    %1363 = vmatpush2.msra.mxu0 0.0
    %1364 = vmatprep.subr.mxu0 0.0
    %1365 = vmatpush2.msra.mxu0 0.0
    %1366 = vmatprep.subr.mxu0 0.0
    %1367 = vmatpush2.msra.mxu0 0.0
    %1368 = vmatprep.subr.mxu0 0.0
    %1369 = vmatpush2.msra.mxu0 0.0
    %1370 = vmatprep.subr.mxu0 0.0
    %1371 = vmatpush2.msra.mxu0 0.0
    %1372 = vmatprep.subr.mxu0 0.0
    %1373 = vmatpush2.msra.mxu0 0.0
    %1374 = vmatprep.subr.mxu0 0.0
    %1375 = vmatpush2.msra.mxu0 0.0
    %1376 = vmatprep.subr.mxu0 0.0
    %1377 = vmatpush2.msra.mxu0 0.0
    %1378 = vmatprep.subr.mxu0 0.0
    %1379 = vmatpush2.msra.mxu0 0.0
    %1380 = vmatprep.subr.mxu0 0.0
    %1381 = vmatpush2.msra.mxu0 0.0
    %1382 = vmatprep.mubr.f32.mxu0 0.0
    %1383 = vmatmul.mubr.f32.gmra.mxu0 %v1316
    %v1384 = vpop.f32.mrf.mxu0
    %v1385 = vadd.f32 0.0, %v1384
    %v1386 = vpop.f32.mrf.mxu0
    %1387 = vdwg.mxu0
    %v1389 = vrot.slane %v1385, 4
    %v1391 = vadd.f32 %v1103, %v1389
    %v1392 = vxor.u32 %v1391, 2147483648
    %v1393 = vmul.f32 %v1392, 1.442695
    %v1394 = vpow.pop %v1393
    %v1395 = vadd.f32 %v1394, 1.0
    %v1396 = vrcp.pop %v1395
    %v1397 = vmul.f32 1.0, %v1396
    %v1398 = vtanh.pop %v1391
    %v1400 = vrot.slane %v1305, 6
    %v1402 = vmul.f32 %v1397, %v1400
    %1404 = vrot.lane.b32.xlu0 %v1398, 64
    %v1405 = vpop.permute.xlu0 %1404
    %v1407 = vmul.f32 %v1397, %v1405
    %1409 = vrot.lane.b32.xlu0 %v1407, 32
    %v1410 = vpop.permute.xlu0 %1409
    %v1412 = vadd.f32 %v1402, %v1410
    %v1413 = vtanh.pop %v1412
    %1415 = vrot.lane.b32.xlu0 %v1413, 64
    %v1416 = vpop.permute.xlu0 %1415
    %v1418 = vmul.f32 %v1397, %v1416
    %v1420 = vrot.slane %v1418, 4
    %1421 = vrot.lane.b32.xlu0 %v1420, 32
    %v1422 = vpop.permute.xlu0 %1421
    %v1423 = vsel %vm159, %v1422, 0
    %1425 = vmatprep.subr.mxu0 0.0
    %1426 = vmatpush1.msra.mxu0 0.0
    %1427 = vmatprep.subr.mxu0 0.0
    %1428 = vmatpush1.msra.mxu0 0.0
    %1429 = vmatprep.subr.mxu0 0.0
    %1430 = vmatpush1.msra.mxu0 0.0
    %1431 = vmatprep.subr.mxu0 0.0
    %1432 = vmatpush1.msra.mxu0 0.0
    %1433 = vmatprep.subr.mxu0 0.0
    %1434 = vmatpush1.msra.mxu0 0.0
    %1435 = vmatprep.subr.mxu0 0.0
    %1436 = vmatpush1.msra.mxu0 0.0
    %1437 = vmatprep.subr.mxu0 0.0
    %1438 = vmatpush1.msra.mxu0 0.0
    %1439 = vmatprep.subr.mxu0 0.0
    %1440 = vmatpush1.msra.mxu0 0.0
    %1441 = vmatprep.subr.mxu0 0.0
    %1442 = vmatpush1.msra.mxu0 0.0
    %1443 = vmatprep.subr.mxu0 0.0
    %1444 = vmatpush1.msra.mxu0 0.0
    %1445 = vmatprep.subr.mxu0 0.0
    %1446 = vmatpush1.msra.mxu0 0.0
    %1447 = vmatprep.subr.mxu0 0.0
    %1448 = vmatpush1.msra.mxu0 0.0
    %1449 = vmatprep.subr.mxu0 0.0
    %1450 = vmatpush1.msra.mxu0 %v1018
    %1451 = vmatprep.subr.mxu0 0.0
    %1452 = vmatpush1.msra.mxu0 %v1017
    %1453 = vmatprep.subr.mxu0 0.0
    %1454 = vmatpush1.msra.mxu0 %v1016
    %1455 = vmatprep.subr.mxu0 0.0
    %1456 = vmatpush1.msra.mxu0 %v1015
    %1457 = vmatprep.subr.mxu0 0.0
    %1458 = vmatpush2.msra.mxu0 0.0
    %1459 = vmatprep.subr.mxu0 0.0
    %1460 = vmatpush2.msra.mxu0 0.0
    %1461 = vmatprep.subr.mxu0 0.0
    %1462 = vmatpush2.msra.mxu0 0.0
    %1463 = vmatprep.subr.mxu0 0.0
    %1464 = vmatpush2.msra.mxu0 0.0
    %1465 = vmatprep.subr.mxu0 0.0
    %1466 = vmatpush2.msra.mxu0 0.0
    %1467 = vmatprep.subr.mxu0 0.0
    %1468 = vmatpush2.msra.mxu0 0.0
    %1469 = vmatprep.subr.mxu0 0.0
    %1470 = vmatpush2.msra.mxu0 0.0
    %1471 = vmatprep.subr.mxu0 0.0
    %1472 = vmatpush2.msra.mxu0 0.0
    %1473 = vmatprep.subr.mxu0 0.0
    %1474 = vmatpush2.msra.mxu0 0.0
    %1475 = vmatprep.subr.mxu0 0.0
    %1476 = vmatpush2.msra.mxu0 0.0
    %1477 = vmatprep.subr.mxu0 0.0
    %1478 = vmatpush2.msra.mxu0 0.0
    %1479 = vmatprep.subr.mxu0 0.0
    %1480 = vmatpush2.msra.mxu0 0.0
    %1481 = vmatprep.subr.mxu0 0.0
    %1482 = vmatpush2.msra.mxu0 0.0
    %1483 = vmatprep.subr.mxu0 0.0
    %1484 = vmatpush2.msra.mxu0 0.0
    %1485 = vmatprep.subr.mxu0 0.0
    %1486 = vmatpush2.msra.mxu0 0.0
    %1487 = vmatprep.subr.mxu0 0.0
    %1488 = vmatpush2.msra.mxu0 0.0
    %1489 = vmatprep.mubr.f32.mxu0 0.0
    %1490 = vmatmul.mubr.f32.gmra.mxu0 %v1423
    %v1491 = vpop.f32.mrf.mxu0
    %v1492 = vadd.f32 0.0, %v1491
    %v1493 = vpop.f32.mrf.mxu0
    %1494 = vdwg.mxu0
    %v1496 = vrot.slane %v1492, 2
    %v1498 = vadd.f32 %v1103, %v1496
    %v1499 = vxor.u32 %v1498, 2147483648
    %v1500 = vmul.f32 %v1499, 1.442695
    %v1501 = vpow.pop %v1500
    %v1502 = vadd.f32 %v1501, 1.0
    %v1503 = vrcp.pop %v1502
    %v1504 = vmul.f32 1.0, %v1503
    %v1505 = vtanh.pop %v1498
    %v1507 = vrot.slane %v1412, 6
    %v1509 = vmul.f32 %v1504, %v1507
    %1511 = vrot.lane.b32.xlu0 %v1505, 64
    %v1512 = vpop.permute.xlu0 %1511
    %v1514 = vmul.f32 %v1504, %v1512
    %1516 = vrot.lane.b32.xlu0 %v1514, 32
    %v1517 = vpop.permute.xlu0 %1516
    %v1519 = vadd.f32 %v1509, %v1517
    %v1520 = vtanh.pop %v1519
    %1522 = vrot.lane.b32.xlu0 %v1520, 64
    %v1523 = vpop.permute.xlu0 %1522
    %v1525 = vmul.f32 %v1504, %v1523
    %v1527 = vrot.slane %v1525, 6
    %1528 = vrot.lane.b32.xlu0 %v1527, 32
    %v1529 = vpop.permute.xlu0 %1528
    %v1530 = vsel %vm159, %v1529, 0
    %1532 = vmatprep.subr.mxu0 0.0
    %1533 = vmatpush1.msra.mxu0 0.0
    %1534 = vmatprep.subr.mxu0 0.0
    %1535 = vmatpush1.msra.mxu0 0.0
    %1536 = vmatprep.subr.mxu0 0.0
    %1537 = vmatpush1.msra.mxu0 0.0
    %1538 = vmatprep.subr.mxu0 0.0
    %1539 = vmatpush1.msra.mxu0 0.0
    %1540 = vmatprep.subr.mxu0 0.0
    %1541 = vmatpush1.msra.mxu0 0.0
    %1542 = vmatprep.subr.mxu0 0.0
    %1543 = vmatpush1.msra.mxu0 0.0
    %1544 = vmatprep.subr.mxu0 0.0
    %1545 = vmatpush1.msra.mxu0 0.0
    %1546 = vmatprep.subr.mxu0 0.0
    %1547 = vmatpush1.msra.mxu0 0.0
    %1548 = vmatprep.subr.mxu0 0.0
    %1549 = vmatpush1.msra.mxu0 0.0
    %1550 = vmatprep.subr.mxu0 0.0
    %1551 = vmatpush1.msra.mxu0 0.0
    %1552 = vmatprep.subr.mxu0 0.0
    %1553 = vmatpush1.msra.mxu0 0.0
    %1554 = vmatprep.subr.mxu0 0.0
    %1555 = vmatpush1.msra.mxu0 0.0
    %1556 = vmatprep.subr.mxu0 0.0
    %1557 = vmatpush1.msra.mxu0 %v1018
    %1558 = vmatprep.subr.mxu0 0.0
    %1559 = vmatpush1.msra.mxu0 %v1017
    %1560 = vmatprep.subr.mxu0 0.0
    %1561 = vmatpush1.msra.mxu0 %v1016
    %1562 = vmatprep.subr.mxu0 0.0
    %1563 = vmatpush1.msra.mxu0 %v1015
    %1564 = vmatprep.subr.mxu0 0.0
    %1565 = vmatpush2.msra.mxu0 0.0
    %1566 = vmatprep.subr.mxu0 0.0
    %1567 = vmatpush2.msra.mxu0 0.0
    %1568 = vmatprep.subr.mxu0 0.0
    %1569 = vmatpush2.msra.mxu0 0.0
    %1570 = vmatprep.subr.mxu0 0.0
    %1571 = vmatpush2.msra.mxu0 0.0
    %1572 = vmatprep.subr.mxu0 0.0
    %1573 = vmatpush2.msra.mxu0 0.0
    %1574 = vmatprep.subr.mxu0 0.0
    %1575 = vmatpush2.msra.mxu0 0.0
    %1576 = vmatprep.subr.mxu0 0.0
    %1577 = vmatpush2.msra.mxu0 0.0
    %1578 = vmatprep.subr.mxu0 0.0
    %1579 = vmatpush2.msra.mxu0 0.0
    %1580 = vmatprep.subr.mxu0 0.0
    %1581 = vmatpush2.msra.mxu0 0.0
    %1582 = vmatprep.subr.mxu0 0.0
    %1583 = vmatpush2.msra.mxu0 0.0
    %1584 = vmatprep.subr.mxu0 0.0
    %1585 = vmatpush2.msra.mxu0 0.0
    %1586 = vmatprep.subr.mxu0 0.0
    %1587 = vmatpush2.msra.mxu0 0.0
    %1588 = vmatprep.subr.mxu0 0.0
    %1589 = vmatpush2.msra.mxu0 0.0
    %1590 = vmatprep.subr.mxu0 0.0
    %1591 = vmatpush2.msra.mxu0 0.0
    %1592 = vmatprep.subr.mxu0 0.0
    %1593 = vmatpush2.msra.mxu0 0.0
    %1594 = vmatprep.subr.mxu0 0.0
    %1595 = vmatpush2.msra.mxu0 0.0
    %1596 = vmatprep.mubr.f32.mxu0 0.0
    %1597 = vmatmul.mubr.f32.gmra.mxu0 %v1530
    %v1598 = vpop.f32.mrf.mxu0
    %v1599 = vadd.f32 0.0, %v1598
    %v1600 = vpop.f32.mrf.mxu0
    %1601 = vdwg.mxu0
    %v1602 = vadd.f32 %v1108, %v1599
    %v1603 = vxor.u32 %v1602, 2147483648
    %v1604 = vmul.f32 %v1603, 1.442695
    %v1605 = vpow.pop %v1604
    %v1606 = vadd.f32 %v1605, 1.0
    %v1607 = vrcp.pop %v1606
    %v1608 = vmul.f32 1.0, %v1607
    %v1609 = vtanh.pop %v1602
    %v1611 = vrot.slane %v1519, 6
    %v1613 = vmul.f32 %v1608, %v1611
    %1615 = vrot.lane.b32.xlu0 %v1609, 64
    %v1616 = vpop.permute.xlu0 %1615
    %v1618 = vmul.f32 %v1608, %v1616
    %1620 = vrot.lane.b32.xlu0 %v1618, 32
    %v1621 = vpop.permute.xlu0 %1620
    %v1623 = vadd.f32 %v1613, %v1621
    %v1624 = vtanh.pop %v1623
    %1626 = vrot.lane.b32.xlu0 %v1624, 64
    %v1627 = vpop.permute.xlu0 %1626
    %v1629 = vmul.f32 %v1608, %v1627
    %1631 = vrot.lane.b32.xlu0 %v1629, 32
    %v1632 = vpop.permute.xlu0 %1631
    %v1633 = vsel %vm159, %v1632, 0
    %1635 = vmatprep.subr.mxu0 0.0
    %1636 = vmatpush1.msra.mxu0 0.0
    %1637 = vmatprep.subr.mxu0 0.0
    %1638 = vmatpush1.msra.mxu0 0.0
    %1639 = vmatprep.subr.mxu0 0.0
    %1640 = vmatpush1.msra.mxu0 0.0
    %1641 = vmatprep.subr.mxu0 0.0
    %1642 = vmatpush1.msra.mxu0 0.0
    %1643 = vmatprep.subr.mxu0 0.0
    %1644 = vmatpush1.msra.mxu0 0.0
    %1645 = vmatprep.subr.mxu0 0.0
    %1646 = vmatpush1.msra.mxu0 0.0
    %1647 = vmatprep.subr.mxu0 0.0
    %1648 = vmatpush1.msra.mxu0 0.0
    %1649 = vmatprep.subr.mxu0 0.0
    %1650 = vmatpush1.msra.mxu0 0.0
    %1651 = vmatprep.subr.mxu0 0.0
    %1652 = vmatpush1.msra.mxu0 0.0
    %1653 = vmatprep.subr.mxu0 0.0
    %1654 = vmatpush1.msra.mxu0 0.0
    %1655 = vmatprep.subr.mxu0 0.0
    %1656 = vmatpush1.msra.mxu0 0.0
    %1657 = vmatprep.subr.mxu0 0.0
    %1658 = vmatpush1.msra.mxu0 0.0
    %1659 = vmatprep.subr.mxu0 0.0
    %1660 = vmatpush1.msra.mxu0 %v1018
    %1661 = vmatprep.subr.mxu0 0.0
    %1662 = vmatpush1.msra.mxu0 %v1017
    %1663 = vmatprep.subr.mxu0 0.0
    %1664 = vmatpush1.msra.mxu0 %v1016
    %1665 = vmatprep.subr.mxu0 0.0
    %1666 = vmatpush1.msra.mxu0 %v1015
    %1667 = vmatprep.subr.mxu0 0.0
    %1668 = vmatpush2.msra.mxu0 0.0
    %1669 = vmatprep.subr.mxu0 0.0
    %1670 = vmatpush2.msra.mxu0 0.0
    %1671 = vmatprep.subr.mxu0 0.0
    %1672 = vmatpush2.msra.mxu0 0.0
    %1673 = vmatprep.subr.mxu0 0.0
    %1674 = vmatpush2.msra.mxu0 0.0
    %1675 = vmatprep.subr.mxu0 0.0
    %1676 = vmatpush2.msra.mxu0 0.0
    %1677 = vmatprep.subr.mxu0 0.0
    %1678 = vmatpush2.msra.mxu0 0.0
    %1679 = vmatprep.subr.mxu0 0.0
    %1680 = vmatpush2.msra.mxu0 0.0
    %1681 = vmatprep.subr.mxu0 0.0
    %1682 = vmatpush2.msra.mxu0 0.0
    %1683 = vmatprep.subr.mxu0 0.0
    %1684 = vmatpush2.msra.mxu0 0.0
    %1685 = vmatprep.subr.mxu0 0.0
    %1686 = vmatpush2.msra.mxu0 0.0
    %1687 = vmatprep.subr.mxu0 0.0
    %1688 = vmatpush2.msra.mxu0 0.0
    %1689 = vmatprep.subr.mxu0 0.0
    %1690 = vmatpush2.msra.mxu0 0.0
    %1691 = vmatprep.subr.mxu0 0.0
    %1692 = vmatpush2.msra.mxu0 0.0
    %1693 = vmatprep.subr.mxu0 0.0
    %1694 = vmatpush2.msra.mxu0 0.0
    %1695 = vmatprep.subr.mxu0 0.0
    %1696 = vmatpush2.msra.mxu0 0.0
    %1697 = vmatprep.subr.mxu0 0.0
    %1698 = vmatpush2.msra.mxu0 0.0
    %1699 = vmatprep.mubr.f32.mxu0 0.0
    %1700 = vmatmul.mubr.f32.gmra.mxu0 %v1633
    %v1701 = vpop.f32.mrf.mxu0
    %v1702 = vadd.f32 0.0, %v1701
    %v1703 = vpop.f32.mrf.mxu0
    %1704 = vdwg.mxu0
    %v1706 = vrot.slane %v1702, 6
    %v1708 = vadd.f32 %v1108, %v1706
    %v1709 = vxor.u32 %v1708, 2147483648
    %v1710 = vmul.f32 %v1709, 1.442695
    %v1711 = vpow.pop %v1710
    %v1712 = vadd.f32 %v1711, 1.0
    %v1713 = vrcp.pop %v1712
    %v1714 = vmul.f32 1.0, %v1713
    %v1715 = vtanh.pop %v1708
    %v1717 = vrot.slane %v1623, 6
    %v1719 = vmul.f32 %v1714, %v1717
    %1721 = vrot.lane.b32.xlu0 %v1715, 64
    %v1722 = vpop.permute.xlu0 %1721
    %v1724 = vmul.f32 %v1714, %v1722
    %1726 = vrot.lane.b32.xlu0 %v1724, 32
    %v1727 = vpop.permute.xlu0 %1726
    %v1729 = vadd.f32 %v1719, %v1727
    %v1730 = vtanh.pop %v1729
    %1732 = vrot.lane.b32.xlu0 %v1730, 64
    %v1733 = vpop.permute.xlu0 %1732
    %v1735 = vmul.f32 %v1714, %v1733
    %v1737 = vrot.slane %v1735, 2
    %1738 = vrot.lane.b32.xlu0 %v1737, 32
    %v1739 = vpop.permute.xlu0 %1738
    %v1740 = vsel %vm159, %v1739, 0
    %1742 = vmatprep.subr.mxu0 0.0
    %1743 = vmatpush1.msra.mxu0 0.0
    %1744 = vmatprep.subr.mxu0 0.0
    %1745 = vmatpush1.msra.mxu0 0.0
    %1746 = vmatprep.subr.mxu0 0.0
    %1747 = vmatpush1.msra.mxu0 0.0
    %1748 = vmatprep.subr.mxu0 0.0
    %1749 = vmatpush1.msra.mxu0 0.0
    %1750 = vmatprep.subr.mxu0 0.0
    %1751 = vmatpush1.msra.mxu0 0.0
    %1752 = vmatprep.subr.mxu0 0.0
    %1753 = vmatpush1.msra.mxu0 0.0
    %1754 = vmatprep.subr.mxu0 0.0
    %1755 = vmatpush1.msra.mxu0 0.0
    %1756 = vmatprep.subr.mxu0 0.0
    %1757 = vmatpush1.msra.mxu0 0.0
    %1758 = vmatprep.subr.mxu0 0.0
    %1759 = vmatpush1.msra.mxu0 0.0
    %1760 = vmatprep.subr.mxu0 0.0
    %1761 = vmatpush1.msra.mxu0 0.0
    %1762 = vmatprep.subr.mxu0 0.0
    %1763 = vmatpush1.msra.mxu0 0.0
    %1764 = vmatprep.subr.mxu0 0.0
    %1765 = vmatpush1.msra.mxu0 0.0
    %1766 = vmatprep.subr.mxu0 0.0
    %1767 = vmatpush1.msra.mxu0 %v1018
    %1768 = vmatprep.subr.mxu0 0.0
    %1769 = vmatpush1.msra.mxu0 %v1017
    %1770 = vmatprep.subr.mxu0 0.0
    %1771 = vmatpush1.msra.mxu0 %v1016
    %1772 = vmatprep.subr.mxu0 0.0
    %1773 = vmatpush1.msra.mxu0 %v1015
    %1774 = vmatprep.subr.mxu0 0.0
    %1775 = vmatpush2.msra.mxu0 0.0
    %1776 = vmatprep.subr.mxu0 0.0
    %1777 = vmatpush2.msra.mxu0 0.0
    %1778 = vmatprep.subr.mxu0 0.0
    %1779 = vmatpush2.msra.mxu0 0.0
    %1780 = vmatprep.subr.mxu0 0.0
    %1781 = vmatpush2.msra.mxu0 0.0
    %1782 = vmatprep.subr.mxu0 0.0
    %1783 = vmatpush2.msra.mxu0 0.0
    %1784 = vmatprep.subr.mxu0 0.0
    %1785 = vmatpush2.msra.mxu0 0.0
    %1786 = vmatprep.subr.mxu0 0.0
    %1787 = vmatpush2.msra.mxu0 0.0
    %1788 = vmatprep.subr.mxu0 0.0
    %1789 = vmatpush2.msra.mxu0 0.0
    %1790 = vmatprep.subr.mxu0 0.0
    %1791 = vmatpush2.msra.mxu0 0.0
    %1792 = vmatprep.subr.mxu0 0.0
    %1793 = vmatpush2.msra.mxu0 0.0
    %1794 = vmatprep.subr.mxu0 0.0
    %1795 = vmatpush2.msra.mxu0 0.0
    %1796 = vmatprep.subr.mxu0 0.0
    %1797 = vmatpush2.msra.mxu0 0.0
    %1798 = vmatprep.subr.mxu0 0.0
    %1799 = vmatpush2.msra.mxu0 0.0
    %1800 = vmatprep.subr.mxu0 0.0
    %1801 = vmatpush2.msra.mxu0 0.0
    %1802 = vmatprep.subr.mxu0 0.0
    %1803 = vmatpush2.msra.mxu0 0.0
    %1804 = vmatprep.subr.mxu0 0.0
    %1805 = vmatpush2.msra.mxu0 0.0
    %1806 = vmatprep.mubr.f32.mxu0 0.0
    %1807 = vmatmul.mubr.f32.gmra.mxu0 %v1740
    %v1808 = vpop.f32.mrf.mxu0
    %v1809 = vadd.f32 0.0, %v1808
    %v1810 = vpop.f32.mrf.mxu0
    %1811 = vdwg.mxu0
    %v1813 = vrot.slane %v1809, 4
    %v1815 = vadd.f32 %v1108, %v1813
    %v1816 = vxor.u32 %v1815, 2147483648
    %v1817 = vmul.f32 %v1816, 1.442695
    %v1818 = vpow.pop %v1817
    %v1819 = vadd.f32 %v1818, 1.0
    %v1820 = vrcp.pop %v1819
    %v1821 = vmul.f32 1.0, %v1820
    %v1822 = vtanh.pop %v1815
    %v1824 = vrot.slane %v1729, 6
    %v1826 = vmul.f32 %v1821, %v1824
    %1828 = vrot.lane.b32.xlu0 %v1822, 64
    %v1829 = vpop.permute.xlu0 %1828
    %v1831 = vmul.f32 %v1821, %v1829
    %1833 = vrot.lane.b32.xlu0 %v1831, 32
    %v1834 = vpop.permute.xlu0 %1833
    %v1836 = vadd.f32 %v1826, %v1834
    %v1837 = vtanh.pop %v1836
    %1839 = vrot.lane.b32.xlu0 %v1837, 64
    %v1840 = vpop.permute.xlu0 %1839
    %v1842 = vmul.f32 %v1821, %v1840
    %v1844 = vrot.slane %v1842, 4
    %1845 = vrot.lane.b32.xlu0 %v1844, 32
    %v1846 = vpop.permute.xlu0 %1845
    %v1847 = vsel %vm159, %v1846, 0
    %1849 = vmatprep.subr.mxu0 0.0
    %1850 = vmatpush1.msra.mxu0 0.0
    %1851 = vmatprep.subr.mxu0 0.0
    %1852 = vmatpush1.msra.mxu0 0.0
    %1853 = vmatprep.subr.mxu0 0.0
    %1854 = vmatpush1.msra.mxu0 0.0
    %1855 = vmatprep.subr.mxu0 0.0
    %1856 = vmatpush1.msra.mxu0 0.0
    %1857 = vmatprep.subr.mxu0 0.0
    %1858 = vmatpush1.msra.mxu0 0.0
    %1859 = vmatprep.subr.mxu0 0.0
    %1860 = vmatpush1.msra.mxu0 0.0
    %1861 = vmatprep.subr.mxu0 0.0
    %1862 = vmatpush1.msra.mxu0 0.0
    %1863 = vmatprep.subr.mxu0 0.0
    %1864 = vmatpush1.msra.mxu0 0.0
    %1865 = vmatprep.subr.mxu0 0.0
    %1866 = vmatpush1.msra.mxu0 0.0
    %1867 = vmatprep.subr.mxu0 0.0
    %1868 = vmatpush1.msra.mxu0 0.0
    %1869 = vmatprep.subr.mxu0 0.0
    %1870 = vmatpush1.msra.mxu0 0.0
    %1871 = vmatprep.subr.mxu0 0.0
    %1872 = vmatpush1.msra.mxu0 0.0
    %1873 = vmatprep.subr.mxu0 0.0
    %1874 = vmatpush1.msra.mxu0 %v1018
    %1875 = vmatprep.subr.mxu0 0.0
    %1876 = vmatpush1.msra.mxu0 %v1017
    %1877 = vmatprep.subr.mxu0 0.0
    %1878 = vmatpush1.msra.mxu0 %v1016
    %1879 = vmatprep.subr.mxu0 0.0
    %1880 = vmatpush1.msra.mxu0 %v1015
    %1881 = vmatprep.subr.mxu0 0.0
    %1882 = vmatpush2.msra.mxu0 0.0
    %1883 = vmatprep.subr.mxu0 0.0
    %1884 = vmatpush2.msra.mxu0 0.0
    %1885 = vmatprep.subr.mxu0 0.0
    %1886 = vmatpush2.msra.mxu0 0.0
    %1887 = vmatprep.subr.mxu0 0.0
    %1888 = vmatpush2.msra.mxu0 0.0
    %1889 = vmatprep.subr.mxu0 0.0
    %1890 = vmatpush2.msra.mxu0 0.0
    %1891 = vmatprep.subr.mxu0 0.0
    %1892 = vmatpush2.msra.mxu0 0.0
    %1893 = vmatprep.subr.mxu0 0.0
    %1894 = vmatpush2.msra.mxu0 0.0
    %1895 = vmatprep.subr.mxu0 0.0
    %1896 = vmatpush2.msra.mxu0 0.0
    %1897 = vmatprep.subr.mxu0 0.0
    %1898 = vmatpush2.msra.mxu0 0.0
    %1899 = vmatprep.subr.mxu0 0.0
    %1900 = vmatpush2.msra.mxu0 0.0
    %1901 = vmatprep.subr.mxu0 0.0
    %1902 = vmatpush2.msra.mxu0 0.0
    %1903 = vmatprep.subr.mxu0 0.0
    %1904 = vmatpush2.msra.mxu0 0.0
    %1905 = vmatprep.subr.mxu0 0.0
    %1906 = vmatpush2.msra.mxu0 0.0
    %1907 = vmatprep.subr.mxu0 0.0
    %1908 = vmatpush2.msra.mxu0 0.0
    %1909 = vmatprep.subr.mxu0 0.0
    %1910 = vmatpush2.msra.mxu0 0.0
    %1911 = vmatprep.subr.mxu0 0.0
    %1912 = vmatpush2.msra.mxu0 0.0
    %1913 = vmatprep.mubr.f32.mxu0 0.0
    %1914 = vmatmul.mubr.f32.gmra.mxu0 %v1847
    %v1915 = vpop.f32.mrf.mxu0
    %v1916 = vadd.f32 0.0, %v1915
    %v1917 = vpop.f32.mrf.mxu0
    %1918 = vdwg.mxu0
    %v1920 = vrot.slane %v1916, 2
    %v1922 = vadd.f32 %v1108, %v1920
    %v1923 = vxor.u32 %v1922, 2147483648
    %v1924 = vmul.f32 %v1923, 1.442695
    %v1925 = vpow.pop %v1924
    %v1926 = vadd.f32 %v1925, 1.0
    %v1927 = vrcp.pop %v1926
    %v1928 = vmul.f32 1.0, %v1927
    %v1929 = vtanh.pop %v1922
    %v1931 = vrot.slane %v1836, 6
    %v1933 = vmul.f32 %v1928, %v1931
    %1935 = vrot.lane.b32.xlu0 %v1929, 64
    %v1936 = vpop.permute.xlu0 %1935
    %v1938 = vmul.f32 %v1928, %v1936
    %1940 = vrot.lane.b32.xlu0 %v1938, 32
    %v1941 = vpop.permute.xlu0 %1940
    %v1943 = vadd.f32 %v1933, %v1941
    %v1944 = vtanh.pop %v1943
    %1946 = vrot.lane.b32.xlu0 %v1944, 64
    %v1947 = vpop.permute.xlu0 %1946
    %v1949 = vmul.f32 %v1928, %v1947
    %v1950 = vld [vmem:[%s7] sm:$0xff]
    %v1951 = vld [vmem:[%s7 + $0x8] sm:$0xff]
    %v1952 = vld [vmem:[%s7 + $0x10] sm:$0xff]
    %v1953 = vld [vmem:[%s7 + $0x18] sm:$0xff]
    %v1954 = vld [vmem:[#allocation2] sm:$0x1]
    %v1956 = vlaneseq
    %v1957 = vshrl.u32 %v1956, 7
    %v1958 = vsub.s32 0, %v1957
    %v1959 = vrot.slane %v1954, %v1958
    %v1962 = vrot.slane %v1949, 6
    %1963 = vrot.lane.b32.xlu0 %v1962, 32
    %v1964 = vpop.permute.xlu0 %1963
    %v1965 = vsel %vm159, %v1964, 0
    %1967 = vmatprep.subr.mxu0 0.0
    %1968 = vmatpush1.msra.mxu0 0.0
    %1969 = vmatprep.subr.mxu0 0.0
    %1970 = vmatpush1.msra.mxu0 0.0
    %1971 = vmatprep.subr.mxu0 0.0
    %1972 = vmatpush1.msra.mxu0 0.0
    %1973 = vmatprep.subr.mxu0 0.0
    %1974 = vmatpush1.msra.mxu0 0.0
    %1975 = vmatprep.subr.mxu0 0.0
    %1976 = vmatpush1.msra.mxu0 0.0
    %1977 = vmatprep.subr.mxu0 0.0
    %1978 = vmatpush1.msra.mxu0 0.0
    %1979 = vmatprep.subr.mxu0 0.0
    %1980 = vmatpush1.msra.mxu0 0.0
    %1981 = vmatprep.subr.mxu0 0.0
    %1982 = vmatpush1.msra.mxu0 0.0
    %1983 = vmatprep.subr.mxu0 0.0
    %1984 = vmatpush1.msra.mxu0 0.0
    %1985 = vmatprep.subr.mxu0 0.0
    %1986 = vmatpush1.msra.mxu0 0.0
    %1987 = vmatprep.subr.mxu0 0.0
    %1988 = vmatpush1.msra.mxu0 0.0
    %1989 = vmatprep.subr.mxu0 0.0
    %1990 = vmatpush1.msra.mxu0 0.0
    %1991 = vmatprep.subr.mxu0 0.0
    %1992 = vmatpush1.msra.mxu0 %v1953
    %1993 = vmatprep.subr.mxu0 0.0
    %1994 = vmatpush1.msra.mxu0 %v1952
    %1995 = vmatprep.subr.mxu0 0.0
    %1996 = vmatpush1.msra.mxu0 %v1951
    %1997 = vmatprep.subr.mxu0 0.0
    %1998 = vmatpush1.msra.mxu0 %v1950
    %1999 = vmatprep.subr.mxu0 0.0
    %2000 = vmatpush2.msra.mxu0 0.0
    %2001 = vmatprep.subr.mxu0 0.0
    %2002 = vmatpush2.msra.mxu0 0.0
    %2003 = vmatprep.subr.mxu0 0.0
    %2004 = vmatpush2.msra.mxu0 0.0
    %2005 = vmatprep.subr.mxu0 0.0
    %2006 = vmatpush2.msra.mxu0 0.0
    %2007 = vmatprep.subr.mxu0 0.0
    %2008 = vmatpush2.msra.mxu0 0.0
    %2009 = vmatprep.subr.mxu0 0.0
    %2010 = vmatpush2.msra.mxu0 0.0
    %2011 = vmatprep.subr.mxu0 0.0
    %2012 = vmatpush2.msra.mxu0 0.0
    %2013 = vmatprep.subr.mxu0 0.0
    %2014 = vmatpush2.msra.mxu0 0.0
    %2015 = vmatprep.subr.mxu0 0.0
    %2016 = vmatpush2.msra.mxu0 0.0
    %2017 = vmatprep.subr.mxu0 0.0
    %2018 = vmatpush2.msra.mxu0 0.0
    %2019 = vmatprep.subr.mxu0 0.0
    %2020 = vmatpush2.msra.mxu0 0.0
    %2021 = vmatprep.subr.mxu0 0.0
    %2022 = vmatpush2.msra.mxu0 0.0
    %2023 = vmatprep.subr.mxu0 0.0
    %2024 = vmatpush2.msra.mxu0 0.0
    %2025 = vmatprep.subr.mxu0 0.0
    %2026 = vmatpush2.msra.mxu0 0.0
    %2027 = vmatprep.subr.mxu0 0.0
    %2028 = vmatpush2.msra.mxu0 0.0
    %2029 = vmatprep.subr.mxu0 0.0
    %2030 = vmatpush2.msra.mxu0 0.0
    %2031 = vmatprep.mubr.f32.mxu0 0.0
    %2032 = vmatmul.mubr.f32.gmra.mxu0 %v1965
    %v2033 = vpop.f32.mrf.mxu0
    %v2034 = vadd.f32 %v1959, %v2033
    %v2035 = vpop.f32.mrf.mxu0
    %2036 = vdwg.mxu0
    %vm2037 = vcmask 1024
    %2038 = vst.msk [vmem:[%s9] sm:$0x3] %vm2037, %v2034
    // Predicated region
    $region46: #{lstm_forward.1} parent=1 // pred_check
      _
    $region47: #{lstm_forward.1} parent=1 // pred_check_branch
      %2040 = sbr.rel (0) target = $region49
    $region48: #{lstm_forward.1} parent=1 // pred_region
      _
    $region49: #{lstm_forward.1} parent=1 // pred_fallthru
      _
    // Predicated region
    $region50: #{lstm_forward.1} parent=1 // pred_check
      _
    $region51: #{lstm_forward.1} parent=1 // pred_check_branch
      %2042 = sbr.rel (0) target = $region53
    $region52: #{lstm_forward.1} parent=1 // pred_region
      _
    $region53: #{lstm_forward.1} parent=1 // pred_fallthru
      _
    %2043 = vsyncpa [#allocation4], 1
    %2044 = vsyncpa [#allocation6], 1

</llo_original>
